<compile_context>
chip_gen: v7x
topology: tpu7x:2x2x1
jax: 0.10.0
libtpu: 0.0.40
codegen_flags: <defaults>
</compile_context>

<pallas_src>
import math

import jax
import jax.numpy as jnp
from jax.experimental import pallas as pl
from jax.experimental.pallas import tpu as pltpu


def _bert_kernel(tok_ref, pe_ref,
                 wih_f_ref, whh_f_ref, b_f_ref,
                 wih_b_ref, whh_b_ref, b_b_ref,
                 fcw_f_ref, fcw_b_ref, fcb_ref,
                 out_ref):
    S, B, E = tok_ref.shape          # B = per-tile (padded) batch
    H = whh_f_ref.shape[0]           # whh stored transposed: (H, 4H)

    # --- fused positional-embedding add: one vectorized pass over the whole block ---
    x_all = tok_ref[...] + pe_ref[...]                           # (S, B, E) f32

    # --- hoisted input projection: single big MXU matmul over all timesteps ---
    x_flat = x_all.reshape(S * B, E).astype(jnp.bfloat16)        # (S*B, E) bf16
    xproj = (jnp.dot(x_flat, wih_f_ref[...],                     # bf16 x bf16 -> f32 acc
                     preferred_element_type=jnp.float32)
             + b_f_ref[...])                                     # (S*B, 4H) f32

    whh_f = whh_f_ref[...]                                       # (H, 4H) bf16

    def gate_step(pre, h, c, whh):
        # PyTorch LSTM gate order: i, f, g, o.  Single hh dot on the critical path.
        gates = pre + jnp.dot(h.astype(jnp.bfloat16), whh,
                              preferred_element_type=jnp.float32)   # (B, 4H) f32
        i = jax.nn.sigmoid(gates[:, 0 * H:1 * H])
        f = jax.nn.sigmoid(gates[:, 1 * H:2 * H])
        g = jnp.tanh(gates[:, 2 * H:3 * H])
        o = jax.nn.sigmoid(gates[:, 3 * H:4 * H])
        c_new = f * c + i * g
        h_new = o * jnp.tanh(c_new)
        return h_new, c_new

    h = jnp.zeros((B, H), jnp.float32)
    c = jnp.zeros((B, H), jnp.float32)

    # Forward direction, fully unrolled (S is static): only one dependent dot per step.
    for t in range(S):
        pre_t = xproj[t * B:(t + 1) * B]                         # static sublane slice
        h, c = gate_step(pre_t, h, c, whh_f)
    h_fwd = h

    # Backward direction: the bidirectional output at position S-1 is the reverse
    # LSTM's hidden state after its *first* step (zero state, input x[S-1]),
    # which is exactly feat[:, -1, hidden:].
    x_last = x_all[S - 1].astype(jnp.bfloat16)                   # (B, E)
    pre_b = (jnp.dot(x_last, wih_b_ref[...],
                     preferred_element_type=jnp.float32)
             + b_b_ref[...])                                     # (B, 4H)
    zeros_h = jnp.zeros((B, H), jnp.float32)
    h_bwd, _ = gate_step(pre_b, zeros_h, zeros_h, whh_b_ref[...])

    # TODO(synk): nn.Dropout(0.1) treated as identity (inference / eval semantics).

    # FC head (out_features=1): broadcast-multiply + lane reduce on VPU/XLU instead of
    # an N=1 MXU matmul, and no lane-concat of the two directions.
    logit = (jnp.sum(h_fwd * fcw_f_ref[...], axis=-1, keepdims=True)
             + jnp.sum(h_bwd * fcw_b_ref[...], axis=-1, keepdims=True)
             + fcb_ref[...])                                     # (B, 1)

    # torch.softmax over a size-1 last axis is identically 1.0; computed without
    # exp/sum so the EUP work is removed while NaN/Inf still propagate like softmax.
    out_ref[...] = (logit - jnp.max(logit, axis=-1, keepdims=True)) + 1.0


def init_params(key, vocab_size, embed_size, hidden_size, max_len=512):
    keys = jax.random.split(key, 12)
    H, E = hidden_size, embed_size

    # tokenEmb passed to the module -> deterministic random table here
    token_emb = jax.random.normal(keys[0], (vocab_size, E), jnp.float32)

    # PositionalEmbedding buffer (same formula as the PyTorch module)
    position = jnp.arange(max_len, dtype=jnp.float32)[:, None]
    div_term = jnp.exp(jnp.arange(0, E, 2, dtype=jnp.float32)
                       * -(math.log(10000.0) / E))
    pe = jnp.zeros((max_len, E), jnp.float32)
    pe = pe.at[:, 0::2].set(jnp.sin(position * div_term))
    pe = pe.at[:, 1::2].set(jnp.cos(position * div_term))

    k = 1.0 / math.sqrt(H)

    def unif(kk, shape, bound):
        return jax.random.uniform(kk, shape, jnp.float32, -bound, bound)

    # PyTorch LSTM params: weight_ih (4H, E), weight_hh (4H, H), two (4H,) biases.
    wih_f = unif(keys[1], (4 * H, E), k)
    whh_f = unif(keys[2], (4 * H, H), k)
    b_f = unif(keys[3], (4 * H,), k) + unif(keys[4], (4 * H,), k)
    wih_b = unif(keys[5], (4 * H, E), k)
    whh_b = unif(keys[6], (4 * H, H), k)
    b_b = unif(keys[7], (4 * H,), k) + unif(keys[8], (4 * H,), k)

    # fc: Linear(2H, 1) -> weight (1, 2H), bias (1,)
    kf = 1.0 / math.sqrt(2 * H)
    fc_w = unif(keys[9], (1, 2 * H), kf)
    fc_b = unif(keys[10], (1,), kf)

    return dict(
        token_emb=token_emb,
        pe=pe,
        # MXU-facing weights pre-transposed (x @ W layout) and pre-cast to bf16
        # (f32 accumulation inside the kernel); biases / FC head stay f32.
        wih_f=wih_f.T.astype(jnp.bfloat16),     # (E, 4H)
        whh_f=whh_f.T.astype(jnp.bfloat16),     # (H, 4H)
        b_f=b_f.reshape(1, 4 * H),              # (1, 4H) = b_ih + b_hh
        wih_b=wih_b.T.astype(jnp.bfloat16),     # (E, 4H)
        whh_b=whh_b.T.astype(jnp.bfloat16),     # (H, 4H)
        b_b=b_b.reshape(1, 4 * H),
        fcw_fwd=fc_w[:, :H],                    # (1, H) forward-direction FC slice
        fcw_bwd=fc_w[:, H:],                    # (1, H) backward-direction FC slice
        fc_b=fc_b.reshape(1, 1),
    )


def bert_forward(x, params, *, batch_tile=8):
    tok_table = params["token_emb"]               # (V, E)
    pe = params["pe"]                             # (max_len, E)
    B, S = x.shape
    E = tok_table.shape[1]

    # glue: embedding gather + time-major transpose.
    # TODO(synk): gather could move in-kernel (scalar-prefetch ids + DMA per chunk) to
    # avoid writing the embedded (S,B,E) tensor through HBM; kept as XLA gather here.
    token_emb = jnp.take(tok_table, x, axis=0)    # (B, S, E)
    tok_sbe = jnp.transpose(token_emb, (1, 0, 2)) # (S, B, E)

    # pad batch to a sublane multiple so the kernel only sees aligned tiles
    Bp = ((B + batch_tile - 1) // batch_tile) * batch_tile
    if Bp != B:
        tok_sbe = jnp.pad(tok_sbe, ((0, 0), (0, Bp - B), (0, 0)))
    pe_s = pe[:S][:, None, :]                     # (S, 1, E)

    args = (tok_sbe, pe_s,
            params["wih_f"], params["whh_f"], params["b_f"],
            params["wih_b"], params["whh_b"], params["b_b"],
            params["fcw_fwd"], params["fcw_bwd"], params["fc_b"])

    nb = Bp // batch_tile                         # batch tiles -> megacore on v7x

    def _full_spec(a):
        return pl.BlockSpec(a.shape, lambda i, n=a.ndim: (0,) * n)

    in_specs = [
        pl.BlockSpec((S, batch_tile, E), lambda i: (0, i, 0)),   # token embeddings
        pl.BlockSpec((S, 1, E), lambda i: (0, 0, 0)),            # positional embedding
    ] + [_full_spec(a) for a in args[2:]]
    out_specs = pl.BlockSpec((batch_tile, 1), lambda i: (i, 0))

    # explicit VMEM budget: double-buffered inputs + output + headroom
    in_bytes = sum(int(a.size) * a.dtype.itemsize for a in args)
    vmem_limit = 2 * (in_bytes + Bp * 4) + (8 << 20)

    out = pl.pallas_call(
        _bert_kernel,
        out_shape=jax.ShapeDtypeStruct((Bp, 1), jnp.float32),
        grid_spec=pltpu.PrefetchScalarGridSpec(
            num_scalar_prefetch=0,
            grid=(nb,),
            in_specs=in_specs,
            out_specs=out_specs),
        compiler_params=pltpu.CompilerParams(
            dimension_semantics=("parallel",),
            vmem_limit_bytes=int(vmem_limit)),
    )(*args)
    return out[:B]


if __name__ == "__main__":
    hidden_size = 32
    vocab_size = 50
    embed_size = 32
    batch_size = 2
    seq_len = 8

    key = jax.random.PRNGKey(0)
    pkey, xkey = jax.random.split(key)

    params = init_params(pkey, vocab_size, embed_size, hidden_size)
    x = jax.random.randint(xkey, (batch_size, seq_len), 0, vocab_size, dtype=jnp.int32)

    out = bert_forward(x, params)
    out = jax.block_until_ready(out)
    assert out.shape == (batch_size, 1)
    assert out.dtype == jnp.float32
    print("KERNEL_OK")
</pallas_src>

<mosaic_0001>
module attributes {stable_mosaic.version = 11 : i64} {
  func.func @_bert_kernel(%arg0: i32, %arg1: memref<8x8x32xf32, #tpu.memory_space<vmem>>, %arg2: memref<8x1x32xf32, #tpu.memory_space<vmem>>, %arg3: memref<32x128xbf16, #tpu.memory_space<vmem>>, %arg4: memref<32x128xbf16, #tpu.memory_space<vmem>>, %arg5: memref<1x128xf32, #tpu.memory_space<vmem>>, %arg6: memref<32x128xbf16, #tpu.memory_space<vmem>>, %arg7: memref<32x128xbf16, #tpu.memory_space<vmem>>, %arg8: memref<1x128xf32, #tpu.memory_space<vmem>>, %arg9: memref<1x32xf32, #tpu.memory_space<vmem>>, %arg10: memref<1x32xf32, #tpu.memory_space<vmem>>, %arg11: memref<1x1xf32, #tpu.memory_space<vmem>>, %arg12: memref<8x1xf32, #tpu.memory_space<vmem>>) attributes {dimension_semantics = [#tpu.dimension_semantics<parallel>], iteration_bounds = array<i64: 1>, scalar_prefetch = 0 : i64, scratch_operands = 0 : i64, tpu.core_type = #tpu.core_type<tc>, window_params = [{transform_indices = @transform_0, window_bounds = array<i64: 8, 8, 32>}, {pipeline_mode = #tpu.pipeline_mode<synchronous>, transform_indices = @transform_1, window_bounds = array<i64: 8, 1, 32>}, {pipeline_mode = #tpu.pipeline_mode<synchronous>, transform_indices = @transform_2, window_bounds = array<i64: 32, 128>}, {pipeline_mode = #tpu.pipeline_mode<synchronous>, transform_indices = @transform_3, window_bounds = array<i64: 32, 128>}, {pipeline_mode = #tpu.pipeline_mode<synchronous>, transform_indices = @transform_4, window_bounds = array<i64: 1, 128>}, {pipeline_mode = #tpu.pipeline_mode<synchronous>, transform_indices = @transform_5, window_bounds = array<i64: 32, 128>}, {pipeline_mode = #tpu.pipeline_mode<synchronous>, transform_indices = @transform_6, window_bounds = array<i64: 32, 128>}, {pipeline_mode = #tpu.pipeline_mode<synchronous>, transform_indices = @transform_7, window_bounds = array<i64: 1, 128>}, {pipeline_mode = #tpu.pipeline_mode<synchronous>, transform_indices = @transform_8, window_bounds = array<i64: 1, 32>}, {pipeline_mode = #tpu.pipeline_mode<synchronous>, transform_indices = @transform_9, window_bounds = array<i64: 1, 32>}, {pipeline_mode = #tpu.pipeline_mode<synchronous>, transform_indices = @transform_10, window_bounds = array<i64: 1, 1>}, {transform_indices = @transform_11, window_bounds = array<i64: 8, 1>}]} {
    %c0 = arith.constant 0 : index
    %c0_0 = arith.constant 0 : index
    %c0_1 = arith.constant 0 : index
    %0 = vector.load %arg1[%c0, %c0_0, %c0_1] : memref<8x8x32xf32, #tpu.memory_space<vmem>>, vector<8x8x32xf32>
    %c0_2 = arith.constant 0 : index
    %c0_3 = arith.constant 0 : index
    %c0_4 = arith.constant 0 : index
    %1 = vector.load %arg2[%c0_2, %c0_3, %c0_4] : memref<8x1x32xf32, #tpu.memory_space<vmem>>, vector<8x1x32xf32>
    %2 = vector.broadcast %1 : vector<8x1x32xf32> to vector<8x8x32xf32>
    %3 = arith.addf %0, %2 : vector<8x8x32xf32>
    %4 = vector.shape_cast %3 : vector<8x8x32xf32> to vector<64x32xf32>
    %5 = arith.truncf %4 : vector<64x32xf32> to vector<64x32xbf16>
    %c0_5 = arith.constant 0 : index
    %c0_6 = arith.constant 0 : index
    %6 = vector.load %arg3[%c0_5, %c0_6] : memref<32x128xbf16, #tpu.memory_space<vmem>>, vector<32x128xbf16>
    %cst = arith.constant dense<0.000000e+00> : vector<64x128xf32>
    %7 = tpu.matmul %5, %6, %cst {dimension_numbers = #tpu.dot_dimension_numbers<[1], [0], [0], [1], [0, 0, 1, 1], [], []>} : vector<64x32xbf16>, vector<32x128xbf16>, vector<64x128xf32> -> vector<64x128xf32>
    %c0_7 = arith.constant 0 : index
    %c0_8 = arith.constant 0 : index
    %8 = vector.load %arg5[%c0_7, %c0_8] : memref<1x128xf32, #tpu.memory_space<vmem>>, vector<1x128xf32>
    %9 = vector.broadcast %8 : vector<1x128xf32> to vector<64x128xf32>
    %10 = arith.addf %7, %9 : vector<64x128xf32>
    %c0_9 = arith.constant 0 : index
    %c0_10 = arith.constant 0 : index
    %11 = vector.load %arg4[%c0_9, %c0_10] : memref<32x128xbf16, #tpu.memory_space<vmem>>, vector<32x128xbf16>
    %cst_11 = arith.constant 0.000000e+00 : f32
    %12 = vector.broadcast %cst_11 : f32 to vector<8x32xf32>
    %cst_12 = arith.constant 0.000000e+00 : f32
    %13 = vector.broadcast %cst_12 : f32 to vector<8x32xf32>
    %14 = vector.extract_strided_slice %10 {offsets = [0, 0], sizes = [8, 128], strides = [1, 1]} : vector<64x128xf32> to vector<8x128xf32>
    %15 = arith.truncf %12 : vector<8x32xf32> to vector<8x32xbf16>
    %cst_13 = arith.constant dense<0.000000e+00> : vector<8x128xf32>
    %16 = tpu.matmul %15, %11, %cst_13 {dimension_numbers = #tpu.dot_dimension_numbers<[1], [0], [0], [1], [0, 0, 1, 1], [], []>} : vector<8x32xbf16>, vector<32x128xbf16>, vector<8x128xf32> -> vector<8x128xf32>
    %17 = arith.addf %14, %16 : vector<8x128xf32>
    %18 = vector.extract_strided_slice %17 {offsets = [0, 0], sizes = [8, 32], strides = [1, 1]} : vector<8x128xf32> to vector<8x32xf32>
    %19 = arith.negf %18 : vector<8x32xf32>
    %20 = math.exp %19 : vector<8x32xf32>
    %cst_14 = arith.constant 1.000000e+00 : f32
    %21 = vector.broadcast %cst_14 : f32 to vector<8x32xf32>
    %22 = arith.addf %21, %20 : vector<8x32xf32>
    %23 = arith.divf %21, %22 : vector<8x32xf32>
    %24 = vector.extract_strided_slice %17 {offsets = [0, 32], sizes = [8, 32], strides = [1, 1]} : vector<8x128xf32> to vector<8x32xf32>
    %25 = arith.negf %24 : vector<8x32xf32>
    %26 = math.exp %25 : vector<8x32xf32>
    %cst_15 = arith.constant 1.000000e+00 : f32
    %27 = vector.broadcast %cst_15 : f32 to vector<8x32xf32>
    %28 = arith.addf %27, %26 : vector<8x32xf32>
    %29 = arith.divf %27, %28 : vector<8x32xf32>
    %30 = vector.extract_strided_slice %17 {offsets = [0, 64], sizes = [8, 32], strides = [1, 1]} : vector<8x128xf32> to vector<8x32xf32>
    %31 = math.tanh %30 : vector<8x32xf32>
    %32 = vector.extract_strided_slice %17 {offsets = [0, 96], sizes = [8, 32], strides = [1, 1]} : vector<8x128xf32> to vector<8x32xf32>
    %33 = arith.negf %32 : vector<8x32xf32>
    %34 = math.exp %33 : vector<8x32xf32>
    %cst_16 = arith.constant 1.000000e+00 : f32
    %35 = vector.broadcast %cst_16 : f32 to vector<8x32xf32>
    %36 = arith.addf %35, %34 : vector<8x32xf32>
    %37 = arith.divf %35, %36 : vector<8x32xf32>
    %38 = arith.mulf %29, %13 : vector<8x32xf32>
    %39 = arith.mulf %23, %31 : vector<8x32xf32>
    %40 = arith.addf %38, %39 : vector<8x32xf32>
    %41 = math.tanh %40 : vector<8x32xf32>
    %42 = arith.mulf %37, %41 : vector<8x32xf32>
    %43 = vector.extract_strided_slice %10 {offsets = [8, 0], sizes = [8, 128], strides = [1, 1]} : vector<64x128xf32> to vector<8x128xf32>
    %44 = arith.truncf %42 : vector<8x32xf32> to vector<8x32xbf16>
    %cst_17 = arith.constant dense<0.000000e+00> : vector<8x128xf32>
    %45 = tpu.matmul %44, %11, %cst_17 {dimension_numbers = #tpu.dot_dimension_numbers<[1], [0], [0], [1], [0, 0, 1, 1], [], []>} : vector<8x32xbf16>, vector<32x128xbf16>, vector<8x128xf32> -> vector<8x128xf32>
    %46 = arith.addf %43, %45 : vector<8x128xf32>
    %47 = vector.extract_strided_slice %46 {offsets = [0, 0], sizes = [8, 32], strides = [1, 1]} : vector<8x128xf32> to vector<8x32xf32>
    %48 = arith.negf %47 : vector<8x32xf32>
    %49 = math.exp %48 : vector<8x32xf32>
    %cst_18 = arith.constant 1.000000e+00 : f32
    %50 = vector.broadcast %cst_18 : f32 to vector<8x32xf32>
    %51 = arith.addf %50, %49 : vector<8x32xf32>
    %52 = arith.divf %50, %51 : vector<8x32xf32>
    %53 = vector.extract_strided_slice %46 {offsets = [0, 32], sizes = [8, 32], strides = [1, 1]} : vector<8x128xf32> to vector<8x32xf32>
    %54 = arith.negf %53 : vector<8x32xf32>
    %55 = math.exp %54 : vector<8x32xf32>
    %cst_19 = arith.constant 1.000000e+00 : f32
    %56 = vector.broadcast %cst_19 : f32 to vector<8x32xf32>
    %57 = arith.addf %56, %55 : vector<8x32xf32>
    %58 = arith.divf %56, %57 : vector<8x32xf32>
    %59 = vector.extract_strided_slice %46 {offsets = [0, 64], sizes = [8, 32], strides = [1, 1]} : vector<8x128xf32> to vector<8x32xf32>
    %60 = math.tanh %59 : vector<8x32xf32>
    %61 = vector.extract_strided_slice %46 {offsets = [0, 96], sizes = [8, 32], strides = [1, 1]} : vector<8x128xf32> to vector<8x32xf32>
    %62 = arith.negf %61 : vector<8x32xf32>
    %63 = math.exp %62 : vector<8x32xf32>
    %cst_20 = arith.constant 1.000000e+00 : f32
    %64 = vector.broadcast %cst_20 : f32 to vector<8x32xf32>
    %65 = arith.addf %64, %63 : vector<8x32xf32>
    %66 = arith.divf %64, %65 : vector<8x32xf32>
    %67 = arith.mulf %58, %40 : vector<8x32xf32>
    %68 = arith.mulf %52, %60 : vector<8x32xf32>
    %69 = arith.addf %67, %68 : vector<8x32xf32>
    %70 = math.tanh %69 : vector<8x32xf32>
    %71 = arith.mulf %66, %70 : vector<8x32xf32>
    %72 = vector.extract_strided_slice %10 {offsets = [16, 0], sizes = [8, 128], strides = [1, 1]} : vector<64x128xf32> to vector<8x128xf32>
    %73 = arith.truncf %71 : vector<8x32xf32> to vector<8x32xbf16>
    %cst_21 = arith.constant dense<0.000000e+00> : vector<8x128xf32>
    %74 = tpu.matmul %73, %11, %cst_21 {dimension_numbers = #tpu.dot_dimension_numbers<[1], [0], [0], [1], [0, 0, 1, 1], [], []>} : vector<8x32xbf16>, vector<32x128xbf16>, vector<8x128xf32> -> vector<8x128xf32>
    %75 = arith.addf %72, %74 : vector<8x128xf32>
    %76 = vector.extract_strided_slice %75 {offsets = [0, 0], sizes = [8, 32], strides = [1, 1]} : vector<8x128xf32> to vector<8x32xf32>
    %77 = arith.negf %76 : vector<8x32xf32>
    %78 = math.exp %77 : vector<8x32xf32>
    %cst_22 = arith.constant 1.000000e+00 : f32
    %79 = vector.broadcast %cst_22 : f32 to vector<8x32xf32>
    %80 = arith.addf %79, %78 : vector<8x32xf32>
    %81 = arith.divf %79, %80 : vector<8x32xf32>
    %82 = vector.extract_strided_slice %75 {offsets = [0, 32], sizes = [8, 32], strides = [1, 1]} : vector<8x128xf32> to vector<8x32xf32>
    %83 = arith.negf %82 : vector<8x32xf32>
    %84 = math.exp %83 : vector<8x32xf32>
    %cst_23 = arith.constant 1.000000e+00 : f32
    %85 = vector.broadcast %cst_23 : f32 to vector<8x32xf32>
    %86 = arith.addf %85, %84 : vector<8x32xf32>
    %87 = arith.divf %85, %86 : vector<8x32xf32>
    %88 = vector.extract_strided_slice %75 {offsets = [0, 64], sizes = [8, 32], strides = [1, 1]} : vector<8x128xf32> to vector<8x32xf32>
    %89 = math.tanh %88 : vector<8x32xf32>
    %90 = vector.extract_strided_slice %75 {offsets = [0, 96], sizes = [8, 32], strides = [1, 1]} : vector<8x128xf32> to vector<8x32xf32>
    %91 = arith.negf %90 : vector<8x32xf32>
    %92 = math.exp %91 : vector<8x32xf32>
    %cst_24 = arith.constant 1.000000e+00 : f32
    %93 = vector.broadcast %cst_24 : f32 to vector<8x32xf32>
    %94 = arith.addf %93, %92 : vector<8x32xf32>
    %95 = arith.divf %93, %94 : vector<8x32xf32>
    %96 = arith.mulf %87, %69 : vector<8x32xf32>
    %97 = arith.mulf %81, %89 : vector<8x32xf32>
    %98 = arith.addf %96, %97 : vector<8x32xf32>
    %99 = math.tanh %98 : vector<8x32xf32>
    %100 = arith.mulf %95, %99 : vector<8x32xf32>
    %101 = vector.extract_strided_slice %10 {offsets = [24, 0], sizes = [8, 128], strides = [1, 1]} : vector<64x128xf32> to vector<8x128xf32>
    %102 = arith.truncf %100 : vector<8x32xf32> to vector<8x32xbf16>
    %cst_25 = arith.constant dense<0.000000e+00> : vector<8x128xf32>
    %103 = tpu.matmul %102, %11, %cst_25 {dimension_numbers = #tpu.dot_dimension_numbers<[1], [0], [0], [1], [0, 0, 1, 1], [], []>} : vector<8x32xbf16>, vector<32x128xbf16>, vector<8x128xf32> -> vector<8x128xf32>
    %104 = arith.addf %101, %103 : vector<8x128xf32>
    %105 = vector.extract_strided_slice %104 {offsets = [0, 0], sizes = [8, 32], strides = [1, 1]} : vector<8x128xf32> to vector<8x32xf32>
    %106 = arith.negf %105 : vector<8x32xf32>
    %107 = math.exp %106 : vector<8x32xf32>
    %cst_26 = arith.constant 1.000000e+00 : f32
    %108 = vector.broadcast %cst_26 : f32 to vector<8x32xf32>
    %109 = arith.addf %108, %107 : vector<8x32xf32>
    %110 = arith.divf %108, %109 : vector<8x32xf32>
    %111 = vector.extract_strided_slice %104 {offsets = [0, 32], sizes = [8, 32], strides = [1, 1]} : vector<8x128xf32> to vector<8x32xf32>
    %112 = arith.negf %111 : vector<8x32xf32>
    %113 = math.exp %112 : vector<8x32xf32>
    %cst_27 = arith.constant 1.000000e+00 : f32
    %114 = vector.broadcast %cst_27 : f32 to vector<8x32xf32>
    %115 = arith.addf %114, %113 : vector<8x32xf32>
    %116 = arith.divf %114, %115 : vector<8x32xf32>
    %117 = vector.extract_strided_slice %104 {offsets = [0, 64], sizes = [8, 32], strides = [1, 1]} : vector<8x128xf32> to vector<8x32xf32>
    %118 = math.tanh %117 : vector<8x32xf32>
    %119 = vector.extract_strided_slice %104 {offsets = [0, 96], sizes = [8, 32], strides = [1, 1]} : vector<8x128xf32> to vector<8x32xf32>
    %120 = arith.negf %119 : vector<8x32xf32>
    %121 = math.exp %120 : vector<8x32xf32>
    %cst_28 = arith.constant 1.000000e+00 : f32
    %122 = vector.broadcast %cst_28 : f32 to vector<8x32xf32>
    %123 = arith.addf %122, %121 : vector<8x32xf32>
    %124 = arith.divf %122, %123 : vector<8x32xf32>
    %125 = arith.mulf %116, %98 : vector<8x32xf32>
    %126 = arith.mulf %110, %118 : vector<8x32xf32>
    %127 = arith.addf %125, %126 : vector<8x32xf32>
    %128 = math.tanh %127 : vector<8x32xf32>
    %129 = arith.mulf %124, %128 : vector<8x32xf32>
    %130 = vector.extract_strided_slice %10 {offsets = [32, 0], sizes = [8, 128], strides = [1, 1]} : vector<64x128xf32> to vector<8x128xf32>
    %131 = arith.truncf %129 : vector<8x32xf32> to vector<8x32xbf16>
    %cst_29 = arith.constant dense<0.000000e+00> : vector<8x128xf32>
    %132 = tpu.matmul %131, %11, %cst_29 {dimension_numbers = #tpu.dot_dimension_numbers<[1], [0], [0], [1], [0, 0, 1, 1], [], []>} : vector<8x32xbf16>, vector<32x128xbf16>, vector<8x128xf32> -> vector<8x128xf32>
    %133 = arith.addf %130, %132 : vector<8x128xf32>
    %134 = vector.extract_strided_slice %133 {offsets = [0, 0], sizes = [8, 32], strides = [1, 1]} : vector<8x128xf32> to vector<8x32xf32>
    %135 = arith.negf %134 : vector<8x32xf32>
    %136 = math.exp %135 : vector<8x32xf32>
    %cst_30 = arith.constant 1.000000e+00 : f32
    %137 = vector.broadcast %cst_30 : f32 to vector<8x32xf32>
    %138 = arith.addf %137, %136 : vector<8x32xf32>
    %139 = arith.divf %137, %138 : vector<8x32xf32>
    %140 = vector.extract_strided_slice %133 {offsets = [0, 32], sizes = [8, 32], strides = [1, 1]} : vector<8x128xf32> to vector<8x32xf32>
    %141 = arith.negf %140 : vector<8x32xf32>
    %142 = math.exp %141 : vector<8x32xf32>
    %cst_31 = arith.constant 1.000000e+00 : f32
    %143 = vector.broadcast %cst_31 : f32 to vector<8x32xf32>
    %144 = arith.addf %143, %142 : vector<8x32xf32>
    %145 = arith.divf %143, %144 : vector<8x32xf32>
    %146 = vector.extract_strided_slice %133 {offsets = [0, 64], sizes = [8, 32], strides = [1, 1]} : vector<8x128xf32> to vector<8x32xf32>
    %147 = math.tanh %146 : vector<8x32xf32>
    %148 = vector.extract_strided_slice %133 {offsets = [0, 96], sizes = [8, 32], strides = [1, 1]} : vector<8x128xf32> to vector<8x32xf32>
    %149 = arith.negf %148 : vector<8x32xf32>
    %150 = math.exp %149 : vector<8x32xf32>
    %cst_32 = arith.constant 1.000000e+00 : f32
    %151 = vector.broadcast %cst_32 : f32 to vector<8x32xf32>
    %152 = arith.addf %151, %150 : vector<8x32xf32>
    %153 = arith.divf %151, %152 : vector<8x32xf32>
    %154 = arith.mulf %145, %127 : vector<8x32xf32>
    %155 = arith.mulf %139, %147 : vector<8x32xf32>
    %156 = arith.addf %154, %155 : vector<8x32xf32>
    %157 = math.tanh %156 : vector<8x32xf32>
    %158 = arith.mulf %153, %157 : vector<8x32xf32>
    %159 = vector.extract_strided_slice %10 {offsets = [40, 0], sizes = [8, 128], strides = [1, 1]} : vector<64x128xf32> to vector<8x128xf32>
    %160 = arith.truncf %158 : vector<8x32xf32> to vector<8x32xbf16>
    %cst_33 = arith.constant dense<0.000000e+00> : vector<8x128xf32>
    %161 = tpu.matmul %160, %11, %cst_33 {dimension_numbers = #tpu.dot_dimension_numbers<[1], [0], [0], [1], [0, 0, 1, 1], [], []>} : vector<8x32xbf16>, vector<32x128xbf16>, vector<8x128xf32> -> vector<8x128xf32>
    %162 = arith.addf %159, %161 : vector<8x128xf32>
    %163 = vector.extract_strided_slice %162 {offsets = [0, 0], sizes = [8, 32], strides = [1, 1]} : vector<8x128xf32> to vector<8x32xf32>
    %164 = arith.negf %163 : vector<8x32xf32>
    %165 = math.exp %164 : vector<8x32xf32>
    %cst_34 = arith.constant 1.000000e+00 : f32
    %166 = vector.broadcast %cst_34 : f32 to vector<8x32xf32>
    %167 = arith.addf %166, %165 : vector<8x32xf32>
    %168 = arith.divf %166, %167 : vector<8x32xf32>
    %169 = vector.extract_strided_slice %162 {offsets = [0, 32], sizes = [8, 32], strides = [1, 1]} : vector<8x128xf32> to vector<8x32xf32>
    %170 = arith.negf %169 : vector<8x32xf32>
    %171 = math.exp %170 : vector<8x32xf32>
    %cst_35 = arith.constant 1.000000e+00 : f32
    %172 = vector.broadcast %cst_35 : f32 to vector<8x32xf32>
    %173 = arith.addf %172, %171 : vector<8x32xf32>
    %174 = arith.divf %172, %173 : vector<8x32xf32>
    %175 = vector.extract_strided_slice %162 {offsets = [0, 64], sizes = [8, 32], strides = [1, 1]} : vector<8x128xf32> to vector<8x32xf32>
    %176 = math.tanh %175 : vector<8x32xf32>
    %177 = vector.extract_strided_slice %162 {offsets = [0, 96], sizes = [8, 32], strides = [1, 1]} : vector<8x128xf32> to vector<8x32xf32>
    %178 = arith.negf %177 : vector<8x32xf32>
    %179 = math.exp %178 : vector<8x32xf32>
    %cst_36 = arith.constant 1.000000e+00 : f32
    %180 = vector.broadcast %cst_36 : f32 to vector<8x32xf32>
    %181 = arith.addf %180, %179 : vector<8x32xf32>
    %182 = arith.divf %180, %181 : vector<8x32xf32>
    %183 = arith.mulf %174, %156 : vector<8x32xf32>
    %184 = arith.mulf %168, %176 : vector<8x32xf32>
    %185 = arith.addf %183, %184 : vector<8x32xf32>
    %186 = math.tanh %185 : vector<8x32xf32>
    %187 = arith.mulf %182, %186 : vector<8x32xf32>
    %188 = vector.extract_strided_slice %10 {offsets = [48, 0], sizes = [8, 128], strides = [1, 1]} : vector<64x128xf32> to vector<8x128xf32>
    %189 = arith.truncf %187 : vector<8x32xf32> to vector<8x32xbf16>
    %cst_37 = arith.constant dense<0.000000e+00> : vector<8x128xf32>
    %190 = tpu.matmul %189, %11, %cst_37 {dimension_numbers = #tpu.dot_dimension_numbers<[1], [0], [0], [1], [0, 0, 1, 1], [], []>} : vector<8x32xbf16>, vector<32x128xbf16>, vector<8x128xf32> -> vector<8x128xf32>
    %191 = arith.addf %188, %190 : vector<8x128xf32>
    %192 = vector.extract_strided_slice %191 {offsets = [0, 0], sizes = [8, 32], strides = [1, 1]} : vector<8x128xf32> to vector<8x32xf32>
    %193 = arith.negf %192 : vector<8x32xf32>
    %194 = math.exp %193 : vector<8x32xf32>
    %cst_38 = arith.constant 1.000000e+00 : f32
    %195 = vector.broadcast %cst_38 : f32 to vector<8x32xf32>
    %196 = arith.addf %195, %194 : vector<8x32xf32>
    %197 = arith.divf %195, %196 : vector<8x32xf32>
    %198 = vector.extract_strided_slice %191 {offsets = [0, 32], sizes = [8, 32], strides = [1, 1]} : vector<8x128xf32> to vector<8x32xf32>
    %199 = arith.negf %198 : vector<8x32xf32>
    %200 = math.exp %199 : vector<8x32xf32>
    %cst_39 = arith.constant 1.000000e+00 : f32
    %201 = vector.broadcast %cst_39 : f32 to vector<8x32xf32>
    %202 = arith.addf %201, %200 : vector<8x32xf32>
    %203 = arith.divf %201, %202 : vector<8x32xf32>
    %204 = vector.extract_strided_slice %191 {offsets = [0, 64], sizes = [8, 32], strides = [1, 1]} : vector<8x128xf32> to vector<8x32xf32>
    %205 = math.tanh %204 : vector<8x32xf32>
    %206 = vector.extract_strided_slice %191 {offsets = [0, 96], sizes = [8, 32], strides = [1, 1]} : vector<8x128xf32> to vector<8x32xf32>
    %207 = arith.negf %206 : vector<8x32xf32>
    %208 = math.exp %207 : vector<8x32xf32>
    %cst_40 = arith.constant 1.000000e+00 : f32
    %209 = vector.broadcast %cst_40 : f32 to vector<8x32xf32>
    %210 = arith.addf %209, %208 : vector<8x32xf32>
    %211 = arith.divf %209, %210 : vector<8x32xf32>
    %212 = arith.mulf %203, %185 : vector<8x32xf32>
    %213 = arith.mulf %197, %205 : vector<8x32xf32>
    %214 = arith.addf %212, %213 : vector<8x32xf32>
    %215 = math.tanh %214 : vector<8x32xf32>
    %216 = arith.mulf %211, %215 : vector<8x32xf32>
    %217 = vector.extract_strided_slice %10 {offsets = [56, 0], sizes = [8, 128], strides = [1, 1]} : vector<64x128xf32> to vector<8x128xf32>
    %218 = arith.truncf %216 : vector<8x32xf32> to vector<8x32xbf16>
    %cst_41 = arith.constant dense<0.000000e+00> : vector<8x128xf32>
    %219 = tpu.matmul %218, %11, %cst_41 {dimension_numbers = #tpu.dot_dimension_numbers<[1], [0], [0], [1], [0, 0, 1, 1], [], []>} : vector<8x32xbf16>, vector<32x128xbf16>, vector<8x128xf32> -> vector<8x128xf32>
    %220 = arith.addf %217, %219 : vector<8x128xf32>
    %221 = vector.extract_strided_slice %220 {offsets = [0, 0], sizes = [8, 32], strides = [1, 1]} : vector<8x128xf32> to vector<8x32xf32>
    %222 = arith.negf %221 : vector<8x32xf32>
    %223 = math.exp %222 : vector<8x32xf32>
    %cst_42 = arith.constant 1.000000e+00 : f32
    %224 = vector.broadcast %cst_42 : f32 to vector<8x32xf32>
    %225 = arith.addf %224, %223 : vector<8x32xf32>
    %226 = arith.divf %224, %225 : vector<8x32xf32>
    %227 = vector.extract_strided_slice %220 {offsets = [0, 32], sizes = [8, 32], strides = [1, 1]} : vector<8x128xf32> to vector<8x32xf32>
    %228 = arith.negf %227 : vector<8x32xf32>
    %229 = math.exp %228 : vector<8x32xf32>
    %cst_43 = arith.constant 1.000000e+00 : f32
    %230 = vector.broadcast %cst_43 : f32 to vector<8x32xf32>
    %231 = arith.addf %230, %229 : vector<8x32xf32>
    %232 = arith.divf %230, %231 : vector<8x32xf32>
    %233 = vector.extract_strided_slice %220 {offsets = [0, 64], sizes = [8, 32], strides = [1, 1]} : vector<8x128xf32> to vector<8x32xf32>
    %234 = math.tanh %233 : vector<8x32xf32>
    %235 = vector.extract_strided_slice %220 {offsets = [0, 96], sizes = [8, 32], strides = [1, 1]} : vector<8x128xf32> to vector<8x32xf32>
    %236 = arith.negf %235 : vector<8x32xf32>
    %237 = math.exp %236 : vector<8x32xf32>
    %cst_44 = arith.constant 1.000000e+00 : f32
    %238 = vector.broadcast %cst_44 : f32 to vector<8x32xf32>
    %239 = arith.addf %238, %237 : vector<8x32xf32>
    %240 = arith.divf %238, %239 : vector<8x32xf32>
    %241 = arith.mulf %232, %214 : vector<8x32xf32>
    %242 = arith.mulf %226, %234 : vector<8x32xf32>
    %243 = arith.addf %241, %242 : vector<8x32xf32>
    %244 = math.tanh %243 : vector<8x32xf32>
    %245 = arith.mulf %240, %244 : vector<8x32xf32>
    %246 = vector.extract_strided_slice %3 {offsets = [7, 0, 0], sizes = [1, 8, 32], strides = [1, 1, 1]} : vector<8x8x32xf32> to vector<1x8x32xf32>
    %247 = vector.shape_cast %246 : vector<1x8x32xf32> to vector<8x32xf32>
    %248 = arith.truncf %247 : vector<8x32xf32> to vector<8x32xbf16>
    %c0_45 = arith.constant 0 : index
    %c0_46 = arith.constant 0 : index
    %249 = vector.load %arg6[%c0_45, %c0_46] : memref<32x128xbf16, #tpu.memory_space<vmem>>, vector<32x128xbf16>
    %cst_47 = arith.constant dense<0.000000e+00> : vector<8x128xf32>
    %250 = tpu.matmul %248, %249, %cst_47 {dimension_numbers = #tpu.dot_dimension_numbers<[1], [0], [0], [1], [0, 0, 1, 1], [], []>} : vector<8x32xbf16>, vector<32x128xbf16>, vector<8x128xf32> -> vector<8x128xf32>
    %c0_48 = arith.constant 0 : index
    %c0_49 = arith.constant 0 : index
    %251 = vector.load %arg8[%c0_48, %c0_49] : memref<1x128xf32, #tpu.memory_space<vmem>>, vector<1x128xf32>
    %252 = vector.broadcast %251 : vector<1x128xf32> to vector<8x128xf32>
    %253 = arith.addf %250, %252 : vector<8x128xf32>
    %cst_50 = arith.constant 0.000000e+00 : f32
    %254 = vector.broadcast %cst_50 : f32 to vector<8x32xf32>
    %c0_51 = arith.constant 0 : index
    %c0_52 = arith.constant 0 : index
    %255 = vector.load %arg7[%c0_51, %c0_52] : memref<32x128xbf16, #tpu.memory_space<vmem>>, vector<32x128xbf16>
    %256 = arith.truncf %254 : vector<8x32xf32> to vector<8x32xbf16>
    %cst_53 = arith.constant dense<0.000000e+00> : vector<8x128xf32>
    %257 = tpu.matmul %256, %255, %cst_53 {dimension_numbers = #tpu.dot_dimension_numbers<[1], [0], [0], [1], [0, 0, 1, 1], [], []>} : vector<8x32xbf16>, vector<32x128xbf16>, vector<8x128xf32> -> vector<8x128xf32>
    %258 = arith.addf %253, %257 : vector<8x128xf32>
    %259 = vector.extract_strided_slice %258 {offsets = [0, 0], sizes = [8, 32], strides = [1, 1]} : vector<8x128xf32> to vector<8x32xf32>
    %260 = arith.negf %259 : vector<8x32xf32>
    %261 = math.exp %260 : vector<8x32xf32>
    %cst_54 = arith.constant 1.000000e+00 : f32
    %262 = vector.broadcast %cst_54 : f32 to vector<8x32xf32>
    %263 = arith.addf %262, %261 : vector<8x32xf32>
    %264 = arith.divf %262, %263 : vector<8x32xf32>
    %265 = vector.extract_strided_slice %258 {offsets = [0, 32], sizes = [8, 32], strides = [1, 1]} : vector<8x128xf32> to vector<8x32xf32>
    %266 = arith.negf %265 : vector<8x32xf32>
    %267 = math.exp %266 : vector<8x32xf32>
    %cst_55 = arith.constant 1.000000e+00 : f32
    %268 = vector.broadcast %cst_55 : f32 to vector<8x32xf32>
    %269 = arith.addf %268, %267 : vector<8x32xf32>
    %270 = arith.divf %268, %269 : vector<8x32xf32>
    %271 = vector.extract_strided_slice %258 {offsets = [0, 64], sizes = [8, 32], strides = [1, 1]} : vector<8x128xf32> to vector<8x32xf32>
    %272 = math.tanh %271 : vector<8x32xf32>
    %273 = vector.extract_strided_slice %258 {offsets = [0, 96], sizes = [8, 32], strides = [1, 1]} : vector<8x128xf32> to vector<8x32xf32>
    %274 = arith.negf %273 : vector<8x32xf32>
    %275 = math.exp %274 : vector<8x32xf32>
    %cst_56 = arith.constant 1.000000e+00 : f32
    %276 = vector.broadcast %cst_56 : f32 to vector<8x32xf32>
    %277 = arith.addf %276, %275 : vector<8x32xf32>
    %278 = arith.divf %276, %277 : vector<8x32xf32>
    %279 = arith.mulf %270, %254 : vector<8x32xf32>
    %280 = arith.mulf %264, %272 : vector<8x32xf32>
    %281 = arith.addf %279, %280 : vector<8x32xf32>
    %282 = math.tanh %281 : vector<8x32xf32>
    %283 = arith.mulf %278, %282 : vector<8x32xf32>
    %c0_57 = arith.constant 0 : index
    %c0_58 = arith.constant 0 : index
    %284 = vector.load %arg9[%c0_57, %c0_58] : memref<1x32xf32, #tpu.memory_space<vmem>>, vector<1x32xf32>
    %285 = vector.broadcast %284 : vector<1x32xf32> to vector<8x32xf32>
    %286 = arith.mulf %245, %285 : vector<8x32xf32>
    %cst_59 = arith.constant dense<0.000000e+00> : vector<8xf32>
    %287 = vector.multi_reduction <add>, %286, %cst_59 [1] : vector<8x32xf32> to vector<8xf32>
    %288 = vector.shape_cast %287 : vector<8xf32> to vector<8x1xf32>
    %c0_60 = arith.constant 0 : index
    %c0_61 = arith.constant 0 : index
    %289 = vector.load %arg10[%c0_60, %c0_61] : memref<1x32xf32, #tpu.memory_space<vmem>>, vector<1x32xf32>
    %290 = vector.broadcast %289 : vector<1x32xf32> to vector<8x32xf32>
    %291 = arith.mulf %283, %290 : vector<8x32xf32>
    %cst_62 = arith.constant dense<0.000000e+00> : vector<8xf32>
    %292 = vector.multi_reduction <add>, %291, %cst_62 [1] : vector<8x32xf32> to vector<8xf32>
    %293 = vector.shape_cast %292 : vector<8xf32> to vector<8x1xf32>
    %294 = arith.addf %288, %293 : vector<8x1xf32>
    %c0_63 = arith.constant 0 : index
    %c0_64 = arith.constant 0 : index
    %295 = vector.load %arg11[%c0_63, %c0_64] : memref<1x1xf32, #tpu.memory_space<vmem>>, vector<1x1xf32>
    %296 = vector.broadcast %295 : vector<1x1xf32> to vector<8x1xf32>
    %297 = arith.addf %294, %296 : vector<8x1xf32>
    %cst_65 = arith.constant dense<0xFF800000> : vector<8xf32>
    %298 = vector.multi_reduction <maximumf>, %297, %cst_65 [1] : vector<8x1xf32> to vector<8xf32>
    %299 = vector.shape_cast %298 : vector<8xf32> to vector<8x1xf32>
    %300 = arith.subf %297, %299 : vector<8x1xf32>
    %cst_66 = arith.constant 1.000000e+00 : f32
    %301 = vector.broadcast %cst_66 : f32 to vector<8x1xf32>
    %302 = arith.addf %300, %301 : vector<8x1xf32>
    %c0_67 = arith.constant 0 : index
    %c0_68 = arith.constant 0 : index
    %303 = vector.load %arg12[%c0_67, %c0_68] : memref<8x1xf32, #tpu.memory_space<vmem>>, vector<8x1xf32>
    tpu.vector_store %arg12[%c0_67, %c0_68], %302 {strides = array<i32>} : memref<8x1xf32, #tpu.memory_space<vmem>>, vector<8x1xf32>,
    return
  }
  func.func @transform_0(%arg0: i32) -> (i32, i32, i32) {
    %c0_i32 = arith.constant 0 : i32
    %c0_i32_0 = arith.constant 0 : i32
    %c0_i32_1 = arith.constant 0 : i32
    return %c0_i32, %arg0, %c0_i32_0 : i32, i32, i32
  }
  func.func @transform_1(%arg0: i32) -> (i32, i32, i32) {
    %c0_i32 = arith.constant 0 : i32
    %c0_i32_0 = arith.constant 0 : i32
    %c0_i32_1 = arith.constant 0 : i32
    %c0_i32_2 = arith.constant 0 : i32
    return %c0_i32, %c0_i32_0, %c0_i32_1 : i32, i32, i32
  }
  func.func @transform_2(%arg0: i32) -> (i32, i32) {
    %c0_i32 = arith.constant 0 : i32
    %c0_i32_0 = arith.constant 0 : i32
    %c0_i32_1 = arith.constant 0 : i32
    return %c0_i32, %c0_i32_0 : i32, i32
  }
  func.func @transform_3(%arg0: i32) -> (i32, i32) {
    %c0_i32 = arith.constant 0 : i32
    %c0_i32_0 = arith.constant 0 : i32
    %c0_i32_1 = arith.constant 0 : i32
    return %c0_i32, %c0_i32_0 : i32, i32
  }
  func.func @transform_4(%arg0: i32) -> (i32, i32) {
    %c0_i32 = arith.constant 0 : i32
    %c0_i32_0 = arith.constant 0 : i32
    %c0_i32_1 = arith.constant 0 : i32
    return %c0_i32, %c0_i32_0 : i32, i32
  }
  func.func @transform_5(%arg0: i32) -> (i32, i32) {
    %c0_i32 = arith.constant 0 : i32
    %c0_i32_0 = arith.constant 0 : i32
    %c0_i32_1 = arith.constant 0 : i32
    return %c0_i32, %c0_i32_0 : i32, i32
  }
  func.func @transform_6(%arg0: i32) -> (i32, i32) {
    %c0_i32 = arith.constant 0 : i32
    %c0_i32_0 = arith.constant 0 : i32
    %c0_i32_1 = arith.constant 0 : i32
    return %c0_i32, %c0_i32_0 : i32, i32
  }
  func.func @transform_7(%arg0: i32) -> (i32, i32) {
    %c0_i32 = arith.constant 0 : i32
    %c0_i32_0 = arith.constant 0 : i32
    %c0_i32_1 = arith.constant 0 : i32
    return %c0_i32, %c0_i32_0 : i32, i32
  }
  func.func @transform_8(%arg0: i32) -> (i32, i32) {
    %c0_i32 = arith.constant 0 : i32
    %c0_i32_0 = arith.constant 0 : i32
    %c0_i32_1 = arith.constant 0 : i32
    return %c0_i32, %c0_i32_0 : i32, i32
  }
  func.func @transform_9(%arg0: i32) -> (i32, i32) {
    %c0_i32 = arith.constant 0 : i32
    %c0_i32_0 = arith.constant 0 : i32
    %c0_i32_1 = arith.constant 0 : i32
    return %c0_i32, %c0_i32_0 : i32, i32
  }
  func.func @transform_10(%arg0: i32) -> (i32, i32) {
    %c0_i32 = arith.constant 0 : i32
    %c0_i32_0 = arith.constant 0 : i32
    %c0_i32_1 = arith.constant 0 : i32
    return %c0_i32, %c0_i32_0 : i32, i32
  }
  func.func @transform_11(%arg0: i32) -> (i32, i32) {
    %c0_i32 = arith.constant 0 : i32
    %c0_i32_0 = arith.constant 0 : i32
    return %arg0, %c0_i32 : i32, i32
  }
}

</mosaic_0001>

<llo_original>
// kernel: tpu_custom_call.1
$region0: #{tpu_custom_call.1}
  #allocation0 [shape = 'u32[]', space=smem, size = 0x4, offset = 0x4, fixed_abs, tag = 'smem constant byte address 0x4 - core index']
  #allocation1 [shape = 'u32[144,128]{1,0:T(1,128)}', space=vmem, size = 0x12000, scoped, tag = 'internal scratch']
  #allocation2 [shape = 'f32[1,1]{1,0:T(1,128)S(1)}', space=vmem, size = 0x200, scoped, tag = 'scoped memory for tpu_custom_call.1']
  %s0 = inlined_call_operand.hbm [shape: f32[8,8,32], index: 0, kind: input, shape index: {}]
  %s1 = inlined_call_operand.hbm [shape: f32[8,1,32], index: 1, kind: input, shape index: {}]
  %s2 = inlined_call_operand.hbm [shape: bf16[32,128], index: 2, kind: input, shape index: {}]
  %s3 = inlined_call_operand.hbm [shape: bf16[32,128], index: 3, kind: input, shape index: {}]
  %s4 = inlined_call_operand.vmem [shape: f32[1,128], index: 4, kind: input, shape index: {}]
  %s5 = inlined_call_operand.vmem [shape: bf16[32,128], index: 5, kind: input, shape index: {}]
  %s6 = inlined_call_operand.hbm [shape: bf16[32,128], index: 6, kind: input, shape index: {}]
  %s7 = inlined_call_operand.vmem [shape: f32[1,128], index: 7, kind: input, shape index: {}]
  %s8 = inlined_call_operand.vmem [shape: f32[1,32], index: 8, kind: input, shape index: {}]
  %s9 = inlined_call_operand.vmem [shape: f32[1,32], index: 9, kind: input, shape index: {}]
  %s10 = inlined_call_operand.<no memory space> [shape: f32[1,1], index: 10, kind: input, shape index: {}]
  %s11 = inlined_call_operand.vmem [shape: f32[8,1], index: 11, kind: output, shape index: {}]
  %s12 = sld [smem:[#allocation0]]
  $region74: #{tpu_custom_call.1} parent=0
    _
  %s14 = ssub.s32 1, %s12
  %s15 = scalar_select 0, %s14, %s12
  %v16 = vstv %s10
  %17 = vst [vmem:[#allocation2] sm:$0x1] %v16
  $region1: #{tpu_custom_call.1} parent=0
    #allocation3 [shape = 'u8[32768]{0}', space=vmem, size = 0x8000, scoped, tag = 'input window, operand 0, single buffered']
    #allocation4 [shape = 's32[1]{0}', space=sflag, size = 0x4, scoped, tag = 'scoped memory for tpu_custom_call.1']
    #allocation5 [shape = 'u8[4096]{0}', space=vmem, size = 0x1000, scoped, tag = 'input window, operand 1, single buffered']
    #allocation6 [shape = 's32[1]{0}', space=sflag, size = 0x4, scoped, tag = 'scoped memory for tpu_custom_call.1']
    #allocation7 [shape = 'u8[8192]{0}', space=vmem, size = 0x2000, scoped, tag = 'input window, operand 2, single buffered']
    #allocation8 [shape = 'u8[8192]{0}', space=vmem, size = 0x2000, scoped, tag = 'input window, operand 3, single buffered']
    #allocation9 [shape = 's32[1]{0}', space=sflag, size = 0x4, scoped, tag = 'scoped memory for tpu_custom_call.1']
    #allocation10 [shape = 'u8[8192]{0}', space=vmem, size = 0x2000, scoped, tag = 'input window, operand 6, single buffered']
    %18 = vsyncpa [#allocation4], 0
    %19 = vsyncpa [#allocation6], 0
    %20 = vsyncpa [#allocation9], 0
    // Predicated region
    $region2: #{tpu_custom_call.1} parent=1 // pred_check
      _
    $region3: #{tpu_custom_call.1} parent=1 // pred_check_branch
      %22 = sbr.rel (0) target = $region5
    $region4: #{tpu_custom_call.1} parent=1 // pred_region
      %s24 = ssub.s32 1024, 1024
      %25 = vsyncadd [#allocation4], %s24
      %s26 = sshll.u32 [#allocation3], 4
      %s27 = int_to_ptr.vmem [resolvable:$true] %s26
      %32 = dma.hbm_to_vmem [thread:$0]  %s0, 1024, %s27, [#allocation4], 128, 128, 8
    $region5: #{tpu_custom_call.1} parent=1 // pred_fallthru
      _
    // Predicated region
    $region6: #{tpu_custom_call.1} parent=1 // pred_check
      _
    $region7: #{tpu_custom_call.1} parent=1 // pred_check_branch
      %34 = sbr.rel (0) target = $region9
    $region8: #{tpu_custom_call.1} parent=1 // pred_region
      %s36 = ssub.s32 128, 128
      %37 = vsyncadd [#allocation6], %s36
      %s38 = sshll.u32 [#allocation5], 4
      %s39 = int_to_ptr.vmem [resolvable:$true] %s38
      %44 = dma.hbm_to_vmem [thread:$0]  %s1, 128, %s39, [#allocation6], 16, 16, 1
    $region9: #{tpu_custom_call.1} parent=1 // pred_fallthru
      _
    // Predicated region
    $region10: #{tpu_custom_call.1} parent=1 // pred_check
      _
    $region11: #{tpu_custom_call.1} parent=1 // pred_check_branch
      %46 = sbr.rel (0) target = $region13
    $region12: #{tpu_custom_call.1} parent=1 // pred_region
      %s48 = ssub.s32 256, 256
      %49 = vsyncadd [#allocation6], %s48
      %s50 = sshll.u32 [#allocation7], 4
      %s51 = int_to_ptr.vmem [resolvable:$true] %s50
      %56 = dma.hbm_to_vmem [thread:$0]  %s2, 256, %s51, [#allocation6], 64, 64, 4
    $region13: #{tpu_custom_call.1} parent=1 // pred_fallthru
      _
    // Predicated region
    $region14: #{tpu_custom_call.1} parent=1 // pred_check
      _
    $region15: #{tpu_custom_call.1} parent=1 // pred_check_branch
      %58 = sbr.rel (0) target = $region17
    $region16: #{tpu_custom_call.1} parent=1 // pred_region
      %s60 = ssub.s32 256, 256
      %61 = vsyncadd [#allocation9], %s60
      %s62 = sshll.u32 [#allocation8], 4
      %s63 = int_to_ptr.vmem [resolvable:$true] %s62
      %68 = dma.hbm_to_vmem [thread:$0]  %s3, 256, %s63, [#allocation9], 64, 64, 4
    $region17: #{tpu_custom_call.1} parent=1 // pred_fallthru
      _
    // Predicated region
    $region18: #{tpu_custom_call.1} parent=1 // pred_check
      _
    $region19: #{tpu_custom_call.1} parent=1 // pred_check_branch
      %70 = sbr.rel (0) target = $region21
    $region20: #{tpu_custom_call.1} parent=1 // pred_region
      _
    $region21: #{tpu_custom_call.1} parent=1 // pred_fallthru
      _
    // Predicated region
    $region22: #{tpu_custom_call.1} parent=1 // pred_check
      _
    $region23: #{tpu_custom_call.1} parent=1 // pred_check_branch
      %72 = sbr.rel (0) target = $region25
    $region24: #{tpu_custom_call.1} parent=1 // pred_region
      _
    $region25: #{tpu_custom_call.1} parent=1 // pred_fallthru
      _
    // Predicated region
    $region26: #{tpu_custom_call.1} parent=1 // pred_check
      _
    $region27: #{tpu_custom_call.1} parent=1 // pred_check_branch
      %74 = sbr.rel (0) target = $region29
    $region28: #{tpu_custom_call.1} parent=1 // pred_region
      %s76 = ssub.s32 256, 256
      %77 = vsyncadd [#allocation9], %s76
      %s78 = sshll.u32 [#allocation10], 4
      %s79 = int_to_ptr.vmem [resolvable:$true] %s78
      %84 = dma.hbm_to_vmem [thread:$0]  %s6, 256, %s79, [#allocation9], 64, 64, 4
    $region29: #{tpu_custom_call.1} parent=1 // pred_fallthru
      _
    // Predicated region
    $region30: #{tpu_custom_call.1} parent=1 // pred_check
      _
    $region31: #{tpu_custom_call.1} parent=1 // pred_check_branch
      %86 = sbr.rel (0) target = $region33
    $region32: #{tpu_custom_call.1} parent=1 // pred_region
      _
    $region33: #{tpu_custom_call.1} parent=1 // pred_fallthru
      _
    // Predicated region
    $region34: #{tpu_custom_call.1} parent=1 // pred_check
      _
    $region35: #{tpu_custom_call.1} parent=1 // pred_check_branch
      %88 = sbr.rel (0) target = $region37
    $region36: #{tpu_custom_call.1} parent=1 // pred_region
      _
    $region37: #{tpu_custom_call.1} parent=1 // pred_fallthru
      _
    // Predicated region
    $region38: #{tpu_custom_call.1} parent=1 // pred_check
      _
    $region39: #{tpu_custom_call.1} parent=1 // pred_check_branch
      %90 = sbr.rel (0) target = $region41
    $region40: #{tpu_custom_call.1} parent=1 // pred_region
      _
    $region41: #{tpu_custom_call.1} parent=1 // pred_fallthru
      _
    // Predicated region
    $region42: #{tpu_custom_call.1} parent=1 // pred_check
      _
    $region43: #{tpu_custom_call.1} parent=1 // pred_check_branch
      %92 = sbr.rel (0) target = $region45
    $region44: #{tpu_custom_call.1} parent=1 // pred_region
      _
    $region45: #{tpu_custom_call.1} parent=1 // pred_fallthru
      _
    // Predicated region
    $region46: #{tpu_custom_call.1} parent=1 // pred_check
      _
    $region47: #{tpu_custom_call.1} parent=1 // pred_check_branch
      %94 = sbr.rel (0) target = $region49
    $region48: #{tpu_custom_call.1} parent=1 // pred_region
      %95 = dma.done [#allocation4], 1024
    $region49: #{tpu_custom_call.1} parent=1 // pred_fallthru
      _
    // Predicated region
    $region50: #{tpu_custom_call.1} parent=1 // pred_check
      _
    $region51: #{tpu_custom_call.1} parent=1 // pred_check_branch
      %97 = sbr.rel (0) target = $region53
    $region52: #{tpu_custom_call.1} parent=1 // pred_region
      %98 = dma.done [#allocation6], 128
    $region53: #{tpu_custom_call.1} parent=1 // pred_fallthru
      _
    // Predicated region
    $region54: #{tpu_custom_call.1} parent=1 // pred_check
      _
    $region55: #{tpu_custom_call.1} parent=1 // pred_check_branch
      %100 = sbr.rel (0) target = $region57
    $region56: #{tpu_custom_call.1} parent=1 // pred_region
      %101 = dma.done [#allocation6], 256
    $region57: #{tpu_custom_call.1} parent=1 // pred_fallthru
      _
    // Predicated region
    $region58: #{tpu_custom_call.1} parent=1 // pred_check
      _
    $region59: #{tpu_custom_call.1} parent=1 // pred_check_branch
      %103 = sbr.rel (0) target = $region61
    $region60: #{tpu_custom_call.1} parent=1 // pred_region
      %104 = dma.done [#allocation9], 256
    $region61: #{tpu_custom_call.1} parent=1 // pred_fallthru
      _
    // Predicated region
    $region62: #{tpu_custom_call.1} parent=1 // pred_check
      _
    $region63: #{tpu_custom_call.1} parent=1 // pred_check_branch
      %106 = sbr.rel (0) target = $region65
    $region64: #{tpu_custom_call.1} parent=1 // pred_region
      %107 = dma.done [#allocation9], 256
    $region65: #{tpu_custom_call.1} parent=1 // pred_fallthru
      _
    %v109 = vld [vmem:[#allocation3] sm:$0xff]
    %v110 = vld [vmem:[#allocation3 + $0x8] sm:$0xff]
    %v111 = vld [vmem:[#allocation3 + $0x10] sm:$0xff]
    %v112 = vld [vmem:[#allocation3 + $0x18] sm:$0xff]
    %v113 = vld [vmem:[#allocation3 + $0x20] sm:$0xff]
    %v114 = vld [vmem:[#allocation3 + $0x28] sm:$0xff]
    %v115 = vld [vmem:[#allocation3 + $0x30] sm:$0xff]
    %v116 = vld [vmem:[#allocation3 + $0x38] sm:$0xff]
    %v117 = vld [vmem:[#allocation5] sm:$0x1]
    %v118 = vld [vmem:[#allocation5 + $0x1] sm:$0x1]
    %v119 = vld [vmem:[#allocation5 + $0x2] sm:$0x1]
    %v120 = vld [vmem:[#allocation5 + $0x3] sm:$0x1]
    %v121 = vld [vmem:[#allocation5 + $0x4] sm:$0x1]
    %v122 = vld [vmem:[#allocation5 + $0x5] sm:$0x1]
    %v123 = vld [vmem:[#allocation5 + $0x6] sm:$0x1]
    %v124 = vld [vmem:[#allocation5 + $0x7] sm:$0x1]
    %v133 = vlaneseq
    %v134 = vshrl.u32 %v133, 7
    %v135 = vsub.s32 0, %v134
    %v136 = vrot.slane %v117, %v135
    %v137 = vlaneseq
    %v138 = vshrl.u32 %v137, 7
    %v139 = vsub.s32 0, %v138
    %v140 = vrot.slane %v118, %v139
    %v141 = vlaneseq
    %v142 = vshrl.u32 %v141, 7
    %v143 = vsub.s32 0, %v142
    %v144 = vrot.slane %v119, %v143
    %v145 = vlaneseq
    %v146 = vshrl.u32 %v145, 7
    %v147 = vsub.s32 0, %v146
    %v148 = vrot.slane %v120, %v147
    %v149 = vlaneseq
    %v150 = vshrl.u32 %v149, 7
    %v151 = vsub.s32 0, %v150
    %v152 = vrot.slane %v121, %v151
    %v153 = vlaneseq
    %v154 = vshrl.u32 %v153, 7
    %v155 = vsub.s32 0, %v154
    %v156 = vrot.slane %v122, %v155
    %v157 = vlaneseq
    %v158 = vshrl.u32 %v157, 7
    %v159 = vsub.s32 0, %v158
    %v160 = vrot.slane %v123, %v159
    %v161 = vlaneseq
    %v162 = vshrl.u32 %v161, 7
    %v163 = vsub.s32 0, %v162
    %v164 = vrot.slane %v124, %v163
    %v173 = vadd.f32 %v109, %v136
    %v174 = vadd.f32 %v110, %v140
    %v175 = vadd.f32 %v111, %v144
    %v176 = vadd.f32 %v112, %v148
    %v177 = vadd.f32 %v113, %v152
    %v178 = vadd.f32 %v114, %v156
    %v179 = vadd.f32 %v115, %v160
    %v180 = vadd.f32 %v116, %v164
    %v181 = vpack.c.bf16 %v174, %v173
    %v182 = vpack.c.bf16 %v176, %v175
    %v183 = vpack.c.bf16 %v178, %v177
    %v184 = vpack.c.bf16 %v180, %v179
    %v185 = vld [vmem:[#allocation7] sm:$0xf]
    %v186 = vld [vmem:[#allocation7 + $0x4] sm:$0xf]
    %v187 = vld [vmem:[#allocation7 + $0x8] sm:$0xf]
    %v188 = vld [vmem:[#allocation7 + $0xc] sm:$0xf]
    %v189 = vld [vmem:[%s4] sm:$0x1]
    %v191 = vlaneseq
    %v192 = vshrl.u32 %v191, 7
    %v193 = vsub.s32 0, %v192
    %v194 = vrot.slane %v189, %v193
    %v200 = vunpack.c.l.b16 %v185
    %v201 = vunpack.c.l.b16 %v186
    %v202 = vunpack.c.l.b16 %v187
    %v203 = vunpack.c.l.b16 %v188
    %v204 = vpack.c.b16 %v201, %v200
    %v205 = vpack.c.b16 %v203, %v202
    %vm208 = vcmask 261120
    %v210 = vsel %vm208, %v181, 0
    %v213 = vsel %vm208, %v182, 0
    %v216 = vsel %vm208, %v183, 0
    %v219 = vsel %vm208, %v184, 0
    %221 = vmatprep.subr.bf16.mxu0 0
    %222 = vmatpush1.bf16.msra.mxu0 %v204
    %223 = vmatprep.subr.bf16.mxu0 0
    %224 = vmatpush1.bf16.msra.mxu0 %v205
    %225 = vmatprep.subr.bf16.mxu0 0
    %226 = vmatpush1.bf16.msra.mxu0 0
    %227 = vmatprep.subr.bf16.mxu0 0
    %228 = vmatpush1.bf16.msra.mxu0 0
    %229 = vmatprep.subr.bf16.mxu0 0
    %230 = vmatpush1.bf16.msra.mxu0 0
    %231 = vmatprep.subr.bf16.mxu0 0
    %232 = vmatpush1.bf16.msra.mxu0 0
    %233 = vmatprep.subr.bf16.mxu0 0
    %234 = vmatpush1.bf16.msra.mxu0 0
    %235 = vmatprep.subr.bf16.mxu0 0
    %236 = vmatpush1.bf16.msra.mxu0 0
    %237 = vmatprep.subr.bf16.mxu0 0
    %238 = vmatpush1.bf16.msra.mxu0 0
    %239 = vmatprep.subr.bf16.mxu0 0
    %240 = vmatpush1.bf16.msra.mxu0 0
    %241 = vmatprep.subr.bf16.mxu0 0
    %242 = vmatpush1.bf16.msra.mxu0 0
    %243 = vmatprep.subr.bf16.mxu0 0
    %244 = vmatpush1.bf16.msra.mxu0 0
    %245 = vmatprep.subr.bf16.mxu0 0
    %246 = vmatpush1.bf16.msra.mxu0 0
    %247 = vmatprep.subr.bf16.mxu0 0
    %248 = vmatpush1.bf16.msra.mxu0 0
    %249 = vmatprep.subr.bf16.mxu0 0
    %250 = vmatpush1.bf16.msra.mxu0 0
    %251 = vmatprep.subr.bf16.mxu0 0
    %252 = vmatpush1.bf16.msra.mxu0 0
    %253 = vmatprep.mubr.bf16.mxu0 0
    %254 = vmatmul.mubr.bf16.gmra.mrb[0].mxu0 %v210
    %v255 = vpop.f32.mrb[0].mxu0
    %v256 = vadd.f32 %v194, %v255
    %v257 = vpop.f32.mrb[0].mxu0
    %v258 = vpop.f32.mrb[0].mxu0
    %v259 = vadd.f32 %v194, %v258
    %v260 = vpop.f32.mrb[0].mxu0
    %261 = vmatprep.mubr.bf16.mxu0 0
    %262 = vmatmul.mubr.bf16.gmra.mrb[0].mxu0 %v213
    %v263 = vpop.f32.mrb[0].mxu0
    %v264 = vadd.f32 %v194, %v263
    %v265 = vpop.f32.mrb[0].mxu0
    %v266 = vpop.f32.mrb[0].mxu0
    %v267 = vadd.f32 %v194, %v266
    %v268 = vpop.f32.mrb[0].mxu0
    %269 = vmatprep.mubr.bf16.mxu0 0
    %270 = vmatmul.mubr.bf16.gmra.mrb[0].mxu0 %v216
    %v271 = vpop.f32.mrb[0].mxu0
    %v272 = vadd.f32 %v194, %v271
    %v273 = vpop.f32.mrb[0].mxu0
    %v274 = vpop.f32.mrb[0].mxu0
    %v275 = vadd.f32 %v194, %v274
    %v276 = vpop.f32.mrb[0].mxu0
    %277 = vmatprep.mubr.bf16.mxu0 0
    %278 = vmatmul.mubr.bf16.gmra.mrb[0].mxu0 %v219
    %v279 = vpop.f32.mrb[0].mxu0
    %v280 = vadd.f32 %v194, %v279
    %v281 = vpop.f32.mrb[0].mxu0
    %v282 = vpop.f32.mrb[0].mxu0
    %v283 = vadd.f32 %v194, %v282
    %v284 = vpop.f32.mrb[0].mxu0
    %285 = vdwg.mxu0
    %v286 = vld [vmem:[#allocation8] sm:$0xf]
    %v287 = vld [vmem:[#allocation8 + $0x4] sm:$0xf]
    %v288 = vld [vmem:[#allocation8 + $0x8] sm:$0xf]
    %v289 = vld [vmem:[#allocation8 + $0xc] sm:$0xf]
    %v294 = vunpack.c.l.b16 %v286
    %v295 = vunpack.c.l.b16 %v287
    %v296 = vunpack.c.l.b16 %v288
    %v297 = vunpack.c.l.b16 %v289
    %v298 = vpack.c.b16 %v295, %v294
    %v299 = vpack.c.b16 %v297, %v296
    %v303 = vsel %vm208, 0, 0
    %305 = vmatprep.subr.bf16.mxu0 0
    %306 = vmatpush1.bf16.msra.mxu0 %v298
    %307 = vmatprep.subr.bf16.mxu0 0
    %308 = vmatpush1.bf16.msra.mxu0 %v299
    %309 = vmatprep.subr.bf16.mxu0 0
    %310 = vmatpush1.bf16.msra.mxu0 0
    %311 = vmatprep.subr.bf16.mxu0 0
    %312 = vmatpush1.bf16.msra.mxu0 0
    %313 = vmatprep.subr.bf16.mxu0 0
    %314 = vmatpush1.bf16.msra.mxu0 0
    %315 = vmatprep.subr.bf16.mxu0 0
    %316 = vmatpush1.bf16.msra.mxu0 0
    %317 = vmatprep.subr.bf16.mxu0 0
    %318 = vmatpush1.bf16.msra.mxu0 0
    %319 = vmatprep.subr.bf16.mxu0 0
    %320 = vmatpush1.bf16.msra.mxu0 0
    %321 = vmatprep.subr.bf16.mxu0 0
    %322 = vmatpush1.bf16.msra.mxu0 0
    %323 = vmatprep.subr.bf16.mxu0 0
    %324 = vmatpush1.bf16.msra.mxu0 0
    %325 = vmatprep.subr.bf16.mxu0 0
    %326 = vmatpush1.bf16.msra.mxu0 0
    %327 = vmatprep.subr.bf16.mxu0 0
    %328 = vmatpush1.bf16.msra.mxu0 0
    %329 = vmatprep.subr.bf16.mxu0 0
    %330 = vmatpush1.bf16.msra.mxu0 0
    %331 = vmatprep.subr.bf16.mxu0 0
    %332 = vmatpush1.bf16.msra.mxu0 0
    %333 = vmatprep.subr.bf16.mxu0 0
    %334 = vmatpush1.bf16.msra.mxu0 0
    %335 = vmatprep.subr.bf16.mxu0 0
    %336 = vmatpush1.bf16.msra.mxu0 0
    %337 = vmatprep.mubr.bf16.mxu0 0
    %338 = vmatmul.mubr.bf16.gmra.mrb[0].mxu0 %v303
    %v339 = vpop.f32.mrb[0].mxu0
    %v340 = vadd.f32 0.0, %v339
    %v341 = vpop.f32.mrb[0].mxu0
    %v342 = vpop.f32.mrb[0].mxu0
    %v343 = vpop.f32.mrb[0].mxu0
    %344 = vdwg.mxu0
    %v345 = vadd.f32 %v256, %v340
    %v346 = vxor.u32 %v345, 2147483648
    %v347 = vmul.f32 %v346, 1.442695
    %v348 = vpow.pop %v347
    %v349 = vadd.f32 %v348, 1.0
    %v350 = vrcp.pop %v349
    %v351 = vmul.f32 1.0, %v350
    %v352 = vtanh.pop %v345
    %v353 = vmul.f32 %v351, 0.0
    %355 = vrot.lane.b32.xlu0 %v352, 64
    %v356 = vpop.permute.xlu0 %355
    %v358 = vmul.f32 %v351, %v356
    %360 = vrot.lane.b32.xlu0 %v358, 32
    %v361 = vpop.permute.xlu0 %360
    %v363 = vadd.f32 %v353, %v361
    %v364 = vtanh.pop %v363
    %366 = vrot.lane.b32.xlu0 %v364, 64
    %v367 = vpop.permute.xlu0 %366
    %v369 = vmul.f32 %v351, %v367
    %v370 = vpack.c.bf16 %v369, %v369
    %372 = vrot.lane.b32.xlu0 %v370, 32
    %v373 = vpop.permute.xlu0 %372
    %v375 = vsel %vm208, %v373, 0
    %377 = vmatprep.subr.bf16.mxu0 0
    %378 = vmatpush1.bf16.msra.mxu0 %v298
    %379 = vmatprep.subr.bf16.mxu0 0
    %380 = vmatpush1.bf16.msra.mxu0 %v299
    %381 = vmatprep.subr.bf16.mxu0 0
    %382 = vmatpush1.bf16.msra.mxu0 0
    %383 = vmatprep.subr.bf16.mxu0 0
    %384 = vmatpush1.bf16.msra.mxu0 0
    %385 = vmatprep.subr.bf16.mxu0 0
    %386 = vmatpush1.bf16.msra.mxu0 0
    %387 = vmatprep.subr.bf16.mxu0 0
    %388 = vmatpush1.bf16.msra.mxu0 0
    %389 = vmatprep.subr.bf16.mxu0 0
    %390 = vmatpush1.bf16.msra.mxu0 0
    %391 = vmatprep.subr.bf16.mxu0 0
    %392 = vmatpush1.bf16.msra.mxu0 0
    %393 = vmatprep.subr.bf16.mxu0 0
    %394 = vmatpush1.bf16.msra.mxu0 0
    %395 = vmatprep.subr.bf16.mxu0 0
    %396 = vmatpush1.bf16.msra.mxu0 0
    %397 = vmatprep.subr.bf16.mxu0 0
    %398 = vmatpush1.bf16.msra.mxu0 0
    %399 = vmatprep.subr.bf16.mxu0 0
    %400 = vmatpush1.bf16.msra.mxu0 0
    %401 = vmatprep.subr.bf16.mxu0 0
    %402 = vmatpush1.bf16.msra.mxu0 0
    %403 = vmatprep.subr.bf16.mxu0 0
    %404 = vmatpush1.bf16.msra.mxu0 0
    %405 = vmatprep.subr.bf16.mxu0 0
    %406 = vmatpush1.bf16.msra.mxu0 0
    %407 = vmatprep.subr.bf16.mxu0 0
    %408 = vmatpush1.bf16.msra.mxu0 0
    %409 = vmatprep.mubr.bf16.mxu0 0
    %410 = vmatmul.mubr.bf16.gmra.mrb[0].mxu0 %v375
    %v411 = vpop.f32.mrb[0].mxu0
    %v412 = vadd.f32 0.0, %v411
    %v413 = vpop.f32.mrb[0].mxu0
    %v414 = vpop.f32.mrb[0].mxu0
    %v415 = vpop.f32.mrb[0].mxu0
    %416 = vdwg.mxu0
    %v417 = vadd.f32 %v259, %v412
    %v418 = vxor.u32 %v417, 2147483648
    %v419 = vmul.f32 %v418, 1.442695
    %v420 = vpow.pop %v419
    %v421 = vadd.f32 %v420, 1.0
    %v422 = vrcp.pop %v421
    %v423 = vmul.f32 1.0, %v422
    %v424 = vtanh.pop %v417
    %v425 = vmul.f32 %v423, %v363
    %427 = vrot.lane.b32.xlu0 %v424, 64
    %v428 = vpop.permute.xlu0 %427
    %v430 = vmul.f32 %v423, %v428
    %432 = vrot.lane.b32.xlu0 %v430, 32
    %v433 = vpop.permute.xlu0 %432
    %v435 = vadd.f32 %v425, %v433
    %v436 = vtanh.pop %v435
    %438 = vrot.lane.b32.xlu0 %v436, 64
    %v439 = vpop.permute.xlu0 %438
    %v441 = vmul.f32 %v423, %v439
    %v442 = vpack.c.bf16 %v441, %v441
    %444 = vrot.lane.b32.xlu0 %v442, 32
    %v445 = vpop.permute.xlu0 %444
    %v447 = vsel %vm208, %v445, 0
    %449 = vmatprep.subr.bf16.mxu0 0
    %450 = vmatpush1.bf16.msra.mxu0 %v298
    %451 = vmatprep.subr.bf16.mxu0 0
    %452 = vmatpush1.bf16.msra.mxu0 %v299
    %453 = vmatprep.subr.bf16.mxu0 0
    %454 = vmatpush1.bf16.msra.mxu0 0
    %455 = vmatprep.subr.bf16.mxu0 0
    %456 = vmatpush1.bf16.msra.mxu0 0
    %457 = vmatprep.subr.bf16.mxu0 0
    %458 = vmatpush1.bf16.msra.mxu0 0
    %459 = vmatprep.subr.bf16.mxu0 0
    %460 = vmatpush1.bf16.msra.mxu0 0
    %461 = vmatprep.subr.bf16.mxu0 0
    %462 = vmatpush1.bf16.msra.mxu0 0
    %463 = vmatprep.subr.bf16.mxu0 0
    %464 = vmatpush1.bf16.msra.mxu0 0
    %465 = vmatprep.subr.bf16.mxu0 0
    %466 = vmatpush1.bf16.msra.mxu0 0
    %467 = vmatprep.subr.bf16.mxu0 0
    %468 = vmatpush1.bf16.msra.mxu0 0
    %469 = vmatprep.subr.bf16.mxu0 0
    %470 = vmatpush1.bf16.msra.mxu0 0
    %471 = vmatprep.subr.bf16.mxu0 0
    %472 = vmatpush1.bf16.msra.mxu0 0
    %473 = vmatprep.subr.bf16.mxu0 0
    %474 = vmatpush1.bf16.msra.mxu0 0
    %475 = vmatprep.subr.bf16.mxu0 0
    %476 = vmatpush1.bf16.msra.mxu0 0
    %477 = vmatprep.subr.bf16.mxu0 0
    %478 = vmatpush1.bf16.msra.mxu0 0
    %479 = vmatprep.subr.bf16.mxu0 0
    %480 = vmatpush1.bf16.msra.mxu0 0
    %481 = vmatprep.mubr.bf16.mxu0 0
    %482 = vmatmul.mubr.bf16.gmra.mrb[0].mxu0 %v447
    %v483 = vpop.f32.mrb[0].mxu0
    %v484 = vadd.f32 0.0, %v483
    %v485 = vpop.f32.mrb[0].mxu0
    %v486 = vpop.f32.mrb[0].mxu0
    %v487 = vpop.f32.mrb[0].mxu0
    %488 = vdwg.mxu0
    %v489 = vadd.f32 %v264, %v484
    %v490 = vxor.u32 %v489, 2147483648
    %v491 = vmul.f32 %v490, 1.442695
    %v492 = vpow.pop %v491
    %v493 = vadd.f32 %v492, 1.0
    %v494 = vrcp.pop %v493
    %v495 = vmul.f32 1.0, %v494
    %v496 = vtanh.pop %v489
    %v497 = vmul.f32 %v495, %v435
    %499 = vrot.lane.b32.xlu0 %v496, 64
    %v500 = vpop.permute.xlu0 %499
    %v502 = vmul.f32 %v495, %v500
    %504 = vrot.lane.b32.xlu0 %v502, 32
    %v505 = vpop.permute.xlu0 %504
    %v507 = vadd.f32 %v497, %v505
    %v508 = vtanh.pop %v507
    %510 = vrot.lane.b32.xlu0 %v508, 64
    %v511 = vpop.permute.xlu0 %510
    %v513 = vmul.f32 %v495, %v511
    %v514 = vpack.c.bf16 %v513, %v513
    %516 = vrot.lane.b32.xlu0 %v514, 32
    %v517 = vpop.permute.xlu0 %516
    %v519 = vsel %vm208, %v517, 0
    %521 = vmatprep.subr.bf16.mxu0 0
    %522 = vmatpush1.bf16.msra.mxu0 %v298
    %523 = vmatprep.subr.bf16.mxu0 0
    %524 = vmatpush1.bf16.msra.mxu0 %v299
    %525 = vmatprep.subr.bf16.mxu0 0
    %526 = vmatpush1.bf16.msra.mxu0 0
    %527 = vmatprep.subr.bf16.mxu0 0
    %528 = vmatpush1.bf16.msra.mxu0 0
    %529 = vmatprep.subr.bf16.mxu0 0
    %530 = vmatpush1.bf16.msra.mxu0 0
    %531 = vmatprep.subr.bf16.mxu0 0
    %532 = vmatpush1.bf16.msra.mxu0 0
    %533 = vmatprep.subr.bf16.mxu0 0
    %534 = vmatpush1.bf16.msra.mxu0 0
    %535 = vmatprep.subr.bf16.mxu0 0
    %536 = vmatpush1.bf16.msra.mxu0 0
    %537 = vmatprep.subr.bf16.mxu0 0
    %538 = vmatpush1.bf16.msra.mxu0 0
    %539 = vmatprep.subr.bf16.mxu0 0
    %540 = vmatpush1.bf16.msra.mxu0 0
    %541 = vmatprep.subr.bf16.mxu0 0
    %542 = vmatpush1.bf16.msra.mxu0 0
    %543 = vmatprep.subr.bf16.mxu0 0
    %544 = vmatpush1.bf16.msra.mxu0 0
    %545 = vmatprep.subr.bf16.mxu0 0
    %546 = vmatpush1.bf16.msra.mxu0 0
    %547 = vmatprep.subr.bf16.mxu0 0
    %548 = vmatpush1.bf16.msra.mxu0 0
    %549 = vmatprep.subr.bf16.mxu0 0
    %550 = vmatpush1.bf16.msra.mxu0 0
    %551 = vmatprep.subr.bf16.mxu0 0
    %552 = vmatpush1.bf16.msra.mxu0 0
    %553 = vmatprep.mubr.bf16.mxu0 0
    %554 = vmatmul.mubr.bf16.gmra.mrb[0].mxu0 %v519
    %v555 = vpop.f32.mrb[0].mxu0
    %v556 = vadd.f32 0.0, %v555
    %v557 = vpop.f32.mrb[0].mxu0
    %v558 = vpop.f32.mrb[0].mxu0
    %v559 = vpop.f32.mrb[0].mxu0
    %560 = vdwg.mxu0
    %v561 = vadd.f32 %v267, %v556
    %v562 = vxor.u32 %v561, 2147483648
    %v563 = vmul.f32 %v562, 1.442695
    %v564 = vpow.pop %v563
    %v565 = vadd.f32 %v564, 1.0
    %v566 = vrcp.pop %v565
    %v567 = vmul.f32 1.0, %v566
    %v568 = vtanh.pop %v561
    %v569 = vmul.f32 %v567, %v507
    %571 = vrot.lane.b32.xlu0 %v568, 64
    %v572 = vpop.permute.xlu0 %571
    %v574 = vmul.f32 %v567, %v572
    %576 = vrot.lane.b32.xlu0 %v574, 32
    %v577 = vpop.permute.xlu0 %576
    %v579 = vadd.f32 %v569, %v577
    %v580 = vtanh.pop %v579
    %582 = vrot.lane.b32.xlu0 %v580, 64
    %v583 = vpop.permute.xlu0 %582
    %v585 = vmul.f32 %v567, %v583
    %v586 = vpack.c.bf16 %v585, %v585
    %588 = vrot.lane.b32.xlu0 %v586, 32
    %v589 = vpop.permute.xlu0 %588
    %v591 = vsel %vm208, %v589, 0
    %593 = vmatprep.subr.bf16.mxu0 0
    %594 = vmatpush1.bf16.msra.mxu0 %v298
    %595 = vmatprep.subr.bf16.mxu0 0
    %596 = vmatpush1.bf16.msra.mxu0 %v299
    %597 = vmatprep.subr.bf16.mxu0 0
    %598 = vmatpush1.bf16.msra.mxu0 0
    %599 = vmatprep.subr.bf16.mxu0 0
    %600 = vmatpush1.bf16.msra.mxu0 0
    %601 = vmatprep.subr.bf16.mxu0 0
    %602 = vmatpush1.bf16.msra.mxu0 0
    %603 = vmatprep.subr.bf16.mxu0 0
    %604 = vmatpush1.bf16.msra.mxu0 0
    %605 = vmatprep.subr.bf16.mxu0 0
    %606 = vmatpush1.bf16.msra.mxu0 0
    %607 = vmatprep.subr.bf16.mxu0 0
    %608 = vmatpush1.bf16.msra.mxu0 0
    %609 = vmatprep.subr.bf16.mxu0 0
    %610 = vmatpush1.bf16.msra.mxu0 0
    %611 = vmatprep.subr.bf16.mxu0 0
    %612 = vmatpush1.bf16.msra.mxu0 0
    %613 = vmatprep.subr.bf16.mxu0 0
    %614 = vmatpush1.bf16.msra.mxu0 0
    %615 = vmatprep.subr.bf16.mxu0 0
    %616 = vmatpush1.bf16.msra.mxu0 0
    %617 = vmatprep.subr.bf16.mxu0 0
    %618 = vmatpush1.bf16.msra.mxu0 0
    %619 = vmatprep.subr.bf16.mxu0 0
    %620 = vmatpush1.bf16.msra.mxu0 0
    %621 = vmatprep.subr.bf16.mxu0 0
    %622 = vmatpush1.bf16.msra.mxu0 0
    %623 = vmatprep.subr.bf16.mxu0 0
    %624 = vmatpush1.bf16.msra.mxu0 0
    %625 = vmatprep.mubr.bf16.mxu0 0
    %626 = vmatmul.mubr.bf16.gmra.mrb[0].mxu0 %v591
    %v627 = vpop.f32.mrb[0].mxu0
    %v628 = vadd.f32 0.0, %v627
    %v629 = vpop.f32.mrb[0].mxu0
    %v630 = vpop.f32.mrb[0].mxu0
    %v631 = vpop.f32.mrb[0].mxu0
    %632 = vdwg.mxu0
    %v633 = vadd.f32 %v272, %v628
    %v634 = vxor.u32 %v633, 2147483648
    %v635 = vmul.f32 %v634, 1.442695
    %v636 = vpow.pop %v635
    %v637 = vadd.f32 %v636, 1.0
    %v638 = vrcp.pop %v637
    %v639 = vmul.f32 1.0, %v638
    %v640 = vtanh.pop %v633
    %v641 = vmul.f32 %v639, %v579
    %643 = vrot.lane.b32.xlu0 %v640, 64
    %v644 = vpop.permute.xlu0 %643
    %v646 = vmul.f32 %v639, %v644
    %648 = vrot.lane.b32.xlu0 %v646, 32
    %v649 = vpop.permute.xlu0 %648
    %v651 = vadd.f32 %v641, %v649
    %v652 = vtanh.pop %v651
    %654 = vrot.lane.b32.xlu0 %v652, 64
    %v655 = vpop.permute.xlu0 %654
    %v657 = vmul.f32 %v639, %v655
    %v658 = vpack.c.bf16 %v657, %v657
    %660 = vrot.lane.b32.xlu0 %v658, 32
    %v661 = vpop.permute.xlu0 %660
    %v663 = vsel %vm208, %v661, 0
    %665 = vmatprep.subr.bf16.mxu0 0
    %666 = vmatpush1.bf16.msra.mxu0 %v298
    %667 = vmatprep.subr.bf16.mxu0 0
    %668 = vmatpush1.bf16.msra.mxu0 %v299
    %669 = vmatprep.subr.bf16.mxu0 0
    %670 = vmatpush1.bf16.msra.mxu0 0
    %671 = vmatprep.subr.bf16.mxu0 0
    %672 = vmatpush1.bf16.msra.mxu0 0
    %673 = vmatprep.subr.bf16.mxu0 0
    %674 = vmatpush1.bf16.msra.mxu0 0
    %675 = vmatprep.subr.bf16.mxu0 0
    %676 = vmatpush1.bf16.msra.mxu0 0
    %677 = vmatprep.subr.bf16.mxu0 0
    %678 = vmatpush1.bf16.msra.mxu0 0
    %679 = vmatprep.subr.bf16.mxu0 0
    %680 = vmatpush1.bf16.msra.mxu0 0
    %681 = vmatprep.subr.bf16.mxu0 0
    %682 = vmatpush1.bf16.msra.mxu0 0
    %683 = vmatprep.subr.bf16.mxu0 0
    %684 = vmatpush1.bf16.msra.mxu0 0
    %685 = vmatprep.subr.bf16.mxu0 0
    %686 = vmatpush1.bf16.msra.mxu0 0
    %687 = vmatprep.subr.bf16.mxu0 0
    %688 = vmatpush1.bf16.msra.mxu0 0
    %689 = vmatprep.subr.bf16.mxu0 0
    %690 = vmatpush1.bf16.msra.mxu0 0
    %691 = vmatprep.subr.bf16.mxu0 0
    %692 = vmatpush1.bf16.msra.mxu0 0
    %693 = vmatprep.subr.bf16.mxu0 0
    %694 = vmatpush1.bf16.msra.mxu0 0
    %695 = vmatprep.subr.bf16.mxu0 0
    %696 = vmatpush1.bf16.msra.mxu0 0
    %697 = vmatprep.mubr.bf16.mxu0 0
    %698 = vmatmul.mubr.bf16.gmra.mrb[0].mxu0 %v663
    %v699 = vpop.f32.mrb[0].mxu0
    %v700 = vadd.f32 0.0, %v699
    %v701 = vpop.f32.mrb[0].mxu0
    %v702 = vpop.f32.mrb[0].mxu0
    %v703 = vpop.f32.mrb[0].mxu0
    %704 = vdwg.mxu0
    %v705 = vadd.f32 %v275, %v700
    %v706 = vxor.u32 %v705, 2147483648
    %v707 = vmul.f32 %v706, 1.442695
    %v708 = vpow.pop %v707
    %v709 = vadd.f32 %v708, 1.0
    %v710 = vrcp.pop %v709
    %v711 = vmul.f32 1.0, %v710
    %v712 = vtanh.pop %v705
    %v713 = vmul.f32 %v711, %v651
    %715 = vrot.lane.b32.xlu0 %v712, 64
    %v716 = vpop.permute.xlu0 %715
    %v718 = vmul.f32 %v711, %v716
    %720 = vrot.lane.b32.xlu0 %v718, 32
    %v721 = vpop.permute.xlu0 %720
    %v723 = vadd.f32 %v713, %v721
    %v724 = vtanh.pop %v723
    %726 = vrot.lane.b32.xlu0 %v724, 64
    %v727 = vpop.permute.xlu0 %726
    %v729 = vmul.f32 %v711, %v727
    %v730 = vpack.c.bf16 %v729, %v729
    %732 = vrot.lane.b32.xlu0 %v730, 32
    %v733 = vpop.permute.xlu0 %732
    %v735 = vsel %vm208, %v733, 0
    %737 = vmatprep.subr.bf16.mxu0 0
    %738 = vmatpush1.bf16.msra.mxu0 %v298
    %739 = vmatprep.subr.bf16.mxu0 0
    %740 = vmatpush1.bf16.msra.mxu0 %v299
    %741 = vmatprep.subr.bf16.mxu0 0
    %742 = vmatpush1.bf16.msra.mxu0 0
    %743 = vmatprep.subr.bf16.mxu0 0
    %744 = vmatpush1.bf16.msra.mxu0 0
    %745 = vmatprep.subr.bf16.mxu0 0
    %746 = vmatpush1.bf16.msra.mxu0 0
    %747 = vmatprep.subr.bf16.mxu0 0
    %748 = vmatpush1.bf16.msra.mxu0 0
    %749 = vmatprep.subr.bf16.mxu0 0
    %750 = vmatpush1.bf16.msra.mxu0 0
    %751 = vmatprep.subr.bf16.mxu0 0
    %752 = vmatpush1.bf16.msra.mxu0 0
    %753 = vmatprep.subr.bf16.mxu0 0
    %754 = vmatpush1.bf16.msra.mxu0 0
    %755 = vmatprep.subr.bf16.mxu0 0
    %756 = vmatpush1.bf16.msra.mxu0 0
    %757 = vmatprep.subr.bf16.mxu0 0
    %758 = vmatpush1.bf16.msra.mxu0 0
    %759 = vmatprep.subr.bf16.mxu0 0
    %760 = vmatpush1.bf16.msra.mxu0 0
    %761 = vmatprep.subr.bf16.mxu0 0
    %762 = vmatpush1.bf16.msra.mxu0 0
    %763 = vmatprep.subr.bf16.mxu0 0
    %764 = vmatpush1.bf16.msra.mxu0 0
    %765 = vmatprep.subr.bf16.mxu0 0
    %766 = vmatpush1.bf16.msra.mxu0 0
    %767 = vmatprep.subr.bf16.mxu0 0
    %768 = vmatpush1.bf16.msra.mxu0 0
    %769 = vmatprep.mubr.bf16.mxu0 0
    %770 = vmatmul.mubr.bf16.gmra.mrb[0].mxu0 %v735
    %v771 = vpop.f32.mrb[0].mxu0
    %v772 = vadd.f32 0.0, %v771
    %v773 = vpop.f32.mrb[0].mxu0
    %v774 = vpop.f32.mrb[0].mxu0
    %v775 = vpop.f32.mrb[0].mxu0
    %776 = vdwg.mxu0
    %v777 = vadd.f32 %v280, %v772
    %v778 = vxor.u32 %v777, 2147483648
    %v779 = vmul.f32 %v778, 1.442695
    %v780 = vpow.pop %v779
    %v781 = vadd.f32 %v780, 1.0
    %v782 = vrcp.pop %v781
    %v783 = vmul.f32 1.0, %v782
    %v784 = vtanh.pop %v777
    %v785 = vmul.f32 %v783, %v723
    %787 = vrot.lane.b32.xlu0 %v784, 64
    %v788 = vpop.permute.xlu0 %787
    %v790 = vmul.f32 %v783, %v788
    %792 = vrot.lane.b32.xlu0 %v790, 32
    %v793 = vpop.permute.xlu0 %792
    %v795 = vadd.f32 %v785, %v793
    %v796 = vtanh.pop %v795
    %798 = vrot.lane.b32.xlu0 %v796, 64
    %v799 = vpop.permute.xlu0 %798
    %v801 = vmul.f32 %v783, %v799
    %v802 = vpack.c.bf16 %v801, %v801
    %804 = vrot.lane.b32.xlu0 %v802, 32
    %v805 = vpop.permute.xlu0 %804
    %v807 = vsel %vm208, %v805, 0
    %809 = vmatprep.subr.bf16.mxu0 0
    %810 = vmatpush1.bf16.msra.mxu0 %v298
    %811 = vmatprep.subr.bf16.mxu0 0
    %812 = vmatpush1.bf16.msra.mxu0 %v299
    %813 = vmatprep.subr.bf16.mxu0 0
    %814 = vmatpush1.bf16.msra.mxu0 0
    %815 = vmatprep.subr.bf16.mxu0 0
    %816 = vmatpush1.bf16.msra.mxu0 0
    %817 = vmatprep.subr.bf16.mxu0 0
    %818 = vmatpush1.bf16.msra.mxu0 0
    %819 = vmatprep.subr.bf16.mxu0 0
    %820 = vmatpush1.bf16.msra.mxu0 0
    %821 = vmatprep.subr.bf16.mxu0 0
    %822 = vmatpush1.bf16.msra.mxu0 0
    %823 = vmatprep.subr.bf16.mxu0 0
    %824 = vmatpush1.bf16.msra.mxu0 0
    %825 = vmatprep.subr.bf16.mxu0 0
    %826 = vmatpush1.bf16.msra.mxu0 0
    %827 = vmatprep.subr.bf16.mxu0 0
    %828 = vmatpush1.bf16.msra.mxu0 0
    %829 = vmatprep.subr.bf16.mxu0 0
    %830 = vmatpush1.bf16.msra.mxu0 0
    %831 = vmatprep.subr.bf16.mxu0 0
    %832 = vmatpush1.bf16.msra.mxu0 0
    %833 = vmatprep.subr.bf16.mxu0 0
    %834 = vmatpush1.bf16.msra.mxu0 0
    %835 = vmatprep.subr.bf16.mxu0 0
    %836 = vmatpush1.bf16.msra.mxu0 0
    %837 = vmatprep.subr.bf16.mxu0 0
    %838 = vmatpush1.bf16.msra.mxu0 0
    %839 = vmatprep.subr.bf16.mxu0 0
    %840 = vmatpush1.bf16.msra.mxu0 0
    %841 = vmatprep.mubr.bf16.mxu0 0
    %842 = vmatmul.mubr.bf16.gmra.mrb[0].mxu0 %v807
    %v843 = vpop.f32.mrb[0].mxu0
    %v844 = vadd.f32 0.0, %v843
    %v845 = vpop.f32.mrb[0].mxu0
    %v846 = vpop.f32.mrb[0].mxu0
    %v847 = vpop.f32.mrb[0].mxu0
    %848 = vdwg.mxu0
    %v849 = vadd.f32 %v283, %v844
    %v850 = vxor.u32 %v849, 2147483648
    %v851 = vmul.f32 %v850, 1.442695
    %v852 = vpow.pop %v851
    %v853 = vadd.f32 %v852, 1.0
    %v854 = vrcp.pop %v853
    %v855 = vmul.f32 1.0, %v854
    %v856 = vtanh.pop %v849
    %v857 = vmul.f32 %v855, %v795
    %859 = vrot.lane.b32.xlu0 %v856, 64
    %v860 = vpop.permute.xlu0 %859
    %v862 = vmul.f32 %v855, %v860
    %864 = vrot.lane.b32.xlu0 %v862, 32
    %v865 = vpop.permute.xlu0 %864
    %v867 = vadd.f32 %v857, %v865
    %v868 = vtanh.pop %v867
    %870 = vrot.lane.b32.xlu0 %v868, 64
    %v871 = vpop.permute.xlu0 %870
    %v873 = vmul.f32 %v855, %v871
    %v874 = vpack.c.bf16 %v180, %v180
    %v875 = vld [vmem:[%s5] sm:$0xf]
    %v876 = vld [vmem:[%s5 + $0x4] sm:$0xf]
    %v877 = vld [vmem:[%s5 + $0x8] sm:$0xf]
    %v878 = vld [vmem:[%s5 + $0xc] sm:$0xf]
    %v879 = vld [vmem:[%s7] sm:$0x1]
    %v881 = vlaneseq
    %v882 = vshrl.u32 %v881, 7
    %v883 = vsub.s32 0, %v882
    %v884 = vrot.slane %v879, %v883
    %v890 = vunpack.c.l.b16 %v875
    %v891 = vunpack.c.l.b16 %v876
    %v892 = vunpack.c.l.b16 %v877
    %v893 = vunpack.c.l.b16 %v878
    %v894 = vpack.c.b16 %v891, %v890
    %v895 = vpack.c.b16 %v893, %v892
    %v899 = vsel %vm208, %v874, 0
    %901 = vmatprep.subr.bf16.mxu0 0
    %902 = vmatpush1.bf16.msra.mxu0 %v894
    %903 = vmatprep.subr.bf16.mxu0 0
    %904 = vmatpush1.bf16.msra.mxu0 %v895
    %905 = vmatprep.subr.bf16.mxu0 0
    %906 = vmatpush1.bf16.msra.mxu0 0
    %907 = vmatprep.subr.bf16.mxu0 0
    %908 = vmatpush1.bf16.msra.mxu0 0
    %909 = vmatprep.subr.bf16.mxu0 0
    %910 = vmatpush1.bf16.msra.mxu0 0
    %911 = vmatprep.subr.bf16.mxu0 0
    %912 = vmatpush1.bf16.msra.mxu0 0
    %913 = vmatprep.subr.bf16.mxu0 0
    %914 = vmatpush1.bf16.msra.mxu0 0
    %915 = vmatprep.subr.bf16.mxu0 0
    %916 = vmatpush1.bf16.msra.mxu0 0
    %917 = vmatprep.subr.bf16.mxu0 0
    %918 = vmatpush1.bf16.msra.mxu0 0
    %919 = vmatprep.subr.bf16.mxu0 0
    %920 = vmatpush1.bf16.msra.mxu0 0
    %921 = vmatprep.subr.bf16.mxu0 0
    %922 = vmatpush1.bf16.msra.mxu0 0
    %923 = vmatprep.subr.bf16.mxu0 0
    %924 = vmatpush1.bf16.msra.mxu0 0
    %925 = vmatprep.subr.bf16.mxu0 0
    %926 = vmatpush1.bf16.msra.mxu0 0
    %927 = vmatprep.subr.bf16.mxu0 0
    %928 = vmatpush1.bf16.msra.mxu0 0
    %929 = vmatprep.subr.bf16.mxu0 0
    %930 = vmatpush1.bf16.msra.mxu0 0
    %931 = vmatprep.subr.bf16.mxu0 0
    %932 = vmatpush1.bf16.msra.mxu0 0
    %933 = vmatprep.mubr.bf16.mxu0 0
    %934 = vmatmul.mubr.bf16.gmra.mrb[0].mxu0 %v899
    %v935 = vpop.f32.mrb[0].mxu0
    %v936 = vadd.f32 %v884, %v935
    %v937 = vpop.f32.mrb[0].mxu0
    %v938 = vpop.f32.mrb[0].mxu0
    %v939 = vpop.f32.mrb[0].mxu0
    %940 = vdwg.mxu0
    %v941 = vld [vmem:[#allocation10] sm:$0xf]
    %v942 = vld [vmem:[#allocation10 + $0x4] sm:$0xf]
    %v943 = vld [vmem:[#allocation10 + $0x8] sm:$0xf]
    %v944 = vld [vmem:[#allocation10 + $0xc] sm:$0xf]
    %v949 = vunpack.c.l.b16 %v941
    %v950 = vunpack.c.l.b16 %v942
    %v951 = vunpack.c.l.b16 %v943
    %v952 = vunpack.c.l.b16 %v944
    %v953 = vpack.c.b16 %v950, %v949
    %v954 = vpack.c.b16 %v952, %v951
    %957 = vmatprep.subr.bf16.mxu0 0
    %958 = vmatpush1.bf16.msra.mxu0 %v953
    %959 = vmatprep.subr.bf16.mxu0 0
    %960 = vmatpush1.bf16.msra.mxu0 %v954
    %961 = vmatprep.subr.bf16.mxu0 0
    %962 = vmatpush1.bf16.msra.mxu0 0
    %963 = vmatprep.subr.bf16.mxu0 0
    %964 = vmatpush1.bf16.msra.mxu0 0
    %965 = vmatprep.subr.bf16.mxu0 0
    %966 = vmatpush1.bf16.msra.mxu0 0
    %967 = vmatprep.subr.bf16.mxu0 0
    %968 = vmatpush1.bf16.msra.mxu0 0
    %969 = vmatprep.subr.bf16.mxu0 0
    %970 = vmatpush1.bf16.msra.mxu0 0
    %971 = vmatprep.subr.bf16.mxu0 0
    %972 = vmatpush1.bf16.msra.mxu0 0
    %973 = vmatprep.subr.bf16.mxu0 0
    %974 = vmatpush1.bf16.msra.mxu0 0
    %975 = vmatprep.subr.bf16.mxu0 0
    %976 = vmatpush1.bf16.msra.mxu0 0
    %977 = vmatprep.subr.bf16.mxu0 0
    %978 = vmatpush1.bf16.msra.mxu0 0
    %979 = vmatprep.subr.bf16.mxu0 0
    %980 = vmatpush1.bf16.msra.mxu0 0
    %981 = vmatprep.subr.bf16.mxu0 0
    %982 = vmatpush1.bf16.msra.mxu0 0
    %983 = vmatprep.subr.bf16.mxu0 0
    %984 = vmatpush1.bf16.msra.mxu0 0
    %985 = vmatprep.subr.bf16.mxu0 0
    %986 = vmatpush1.bf16.msra.mxu0 0
    %987 = vmatprep.subr.bf16.mxu0 0
    %988 = vmatpush1.bf16.msra.mxu0 0
    %989 = vmatprep.mubr.bf16.mxu0 0
    %990 = vmatmul.mubr.bf16.gmra.mrb[0].mxu0 %v303
    %v991 = vpop.f32.mrb[0].mxu0
    %v992 = vadd.f32 0.0, %v991
    %v993 = vpop.f32.mrb[0].mxu0
    %v994 = vpop.f32.mrb[0].mxu0
    %v995 = vpop.f32.mrb[0].mxu0
    %996 = vdwg.mxu0
    %v997 = vadd.f32 %v936, %v992
    %v998 = vxor.u32 %v997, 2147483648
    %v999 = vmul.f32 %v998, 1.442695
    %v1000 = vpow.pop %v999
    %v1001 = vadd.f32 %v1000, 1.0
    %v1002 = vrcp.pop %v1001
    %v1003 = vmul.f32 1.0, %v1002
    %v1004 = vtanh.pop %v997
    %v1005 = vmul.f32 %v1003, 0.0
    %1007 = vrot.lane.b32.xlu0 %v1004, 64
    %v1008 = vpop.permute.xlu0 %1007
    %v1010 = vmul.f32 %v1003, %v1008
    %1012 = vrot.lane.b32.xlu0 %v1010, 32
    %v1013 = vpop.permute.xlu0 %1012
    %v1015 = vadd.f32 %v1005, %v1013
    %v1016 = vtanh.pop %v1015
    %1018 = vrot.lane.b32.xlu0 %v1016, 64
    %v1019 = vpop.permute.xlu0 %1018
    %v1021 = vmul.f32 %v1003, %v1019
    %v1022 = vld [vmem:[%s8] sm:$0x1]
    %v1024 = vlaneseq
    %v1025 = vshrl.u32 %v1024, 7
    %v1026 = vsub.s32 0, %v1025
    %v1027 = vrot.slane %v1022, %v1026
    %1028 = vrot.lane.b32.xlu0 %v1027, 96
    %v1029 = vpop.permute.xlu0 %1028
    %v1031 = vmul.f32 %v873, %v1029
    %1033 = vrot.lane.b32.xlu0 %v1031, 32
    %v1034 = vpop.permute.xlu0 %1033
    %v1036 = vsel %vm208, %v1034, 0.0
    %1037 = vadd.xlane.f32.xlu0 %v1036
    %v1038 = vpop.xlane.xlu0 %1037
    %v1039 = vld [vmem:[%s9] sm:$0x1]
    %v1041 = vlaneseq
    %v1042 = vshrl.u32 %v1041, 7
    %v1043 = vsub.s32 0, %v1042
    %v1044 = vrot.slane %v1039, %v1043
    %1045 = vrot.lane.b32.xlu0 %v1044, 96
    %v1046 = vpop.permute.xlu0 %1045
    %v1048 = vmul.f32 %v1021, %v1046
    %1050 = vrot.lane.b32.xlu0 %v1048, 32
    %v1051 = vpop.permute.xlu0 %1050
    %v1053 = vsel %vm208, %v1051, 0.0
    %1054 = vadd.xlane.f32.xlu0 %v1053
    %v1055 = vpop.xlane.xlu0 %1054
    %v1056 = vadd.f32 %v1038, %v1055
    %v1057 = vld [vmem:[#allocation2] sm:$0x1]
    %v1059 = vlaneseq
    %v1060 = vshrl.u32 %v1059, 7
    %v1061 = vsub.s32 0, %v1060
    %v1062 = vrot.slane %v1057, %v1061
    %v1064 = vadd.f32 %v1056, %v1062
    %v1065 = vsub.f32 %v1064, %v1064
    %v1066 = vadd.f32 %v1065, 1.0
    %vm1067 = vcmask 7168
    %1068 = vst.msk [vmem:[%s11] sm:$0xff] %vm1067, %v1066
    // Predicated region
    $region66: #{tpu_custom_call.1} parent=1 // pred_check
      _
    $region67: #{tpu_custom_call.1} parent=1 // pred_check_branch
      %1070 = sbr.rel (0) target = $region69
    $region68: #{tpu_custom_call.1} parent=1 // pred_region
      _
    $region69: #{tpu_custom_call.1} parent=1 // pred_fallthru
      _
    // Predicated region
    $region70: #{tpu_custom_call.1} parent=1 // pred_check
      _
    $region71: #{tpu_custom_call.1} parent=1 // pred_check_branch
      %1072 = sbr.rel (0) target = $region73
    $region72: #{tpu_custom_call.1} parent=1 // pred_region
      _
    $region73: #{tpu_custom_call.1} parent=1 // pred_fallthru
      _
    %1073 = vsyncpa [#allocation4], 1
    %1074 = vsyncpa [#allocation6], 1
    %1075 = vsyncpa [#allocation9], 1

</llo_original>
